<compile_context>
chip_gen: v7x
topology: tpu7x:2x2x1
jax: 0.10.0
libtpu: 0.0.40
codegen_flags: <defaults>
</compile_context>

<pallas_src>
import jax
import jax.numpy as jnp
from jax.experimental import pallas as pl
from jax.experimental.pallas import tpu as pltpu

# ---- problem constants implied by the module's __init__ ----
IN_LEN = 100                         # Linear dim is hard-coded for input length 100
K = 10                               # kernel_size == stride
T1 = (IN_LEN - K) // K + 1           # = 10  (conv1 output length)
T2 = (T1 - K) // K + 1               # = 1   (conv2 output length)
C1 = 128
C2 = 256
OUT_DIM = 1
D1 = T1 * K                          # 100   (flat input length per sample)
D1P = 128                            # input padded to a full MXU-depth / aligned row
D2 = T1 * C1                         # 1280  (flat conv1 activation per sample)
CCH = 256                            # chunk width of the conv1->conv2 reduction
N_CHUNKS = D2 // CCH                 # 5


def _network_kernel(x_ref, w1_ref, b1_ref, w2_ref, b2_ref, w3_ref, b3_ref, out_ref):
    """Fused conv1 -> relu -> conv2 -> relu -> linear for one batch tile.

    x_ref  : (TB, 128)            zero-padded lane-dense input slab
    w1_ref : (5, 128, 256)        conv1 block-diag weight, chunked over output cols
    b1_ref : (1, 256)             conv1 bias for one chunk (two taps -> [b1, b1])
    w2_ref : (5, 256, 256)        conv2 weight, chunked over its contraction rows
    b2_ref : (1, 256)
    w3_ref : (1, 256)             linear weight row
    b3_ref : (1, 1)
    out_ref: (TB, 1)
    """
    x = x_ref[...]                                            # (TB, 128)
    tb = x.shape[0]
    acc = jnp.zeros((tb, C2), jnp.float32)
    b1 = b1_ref[...]
    # Static 5-iteration loop (unrolled at trace time): conv1 chunk -> ReLU ->
    # conv2 chunk accumulate.  Live f32 intermediate stays at (TB, 256).
    for c in range(N_CHUNKS):
        h1c = jnp.dot(x, w1_ref[c], preferred_element_type=jnp.float32) + b1
        h1c = jnp.maximum(h1c, 0.0)                           # ReLU #1 chunk
        acc = acc + jnp.dot(h1c, w2_ref[c], preferred_element_type=jnp.float32)
    h2 = jnp.maximum(acc + b2_ref[...], 0.0)                  # ReLU #2, (TB, 256)
    # Flatten is a no-op (T2 == 1).  Linear(256 -> 1) as VPU mul + lane reduce.
    out_ref[...] = jnp.sum(h2 * w3_ref[...], axis=-1, keepdims=True) + b3_ref[...]


def _round_up(n, m):
    return ((n + m - 1) // m) * m


def prepare_params(params):
    """One-time relayout of torch-layout weights into kernel-friendly slabs."""
    W1, b1, W2, b2, W3, b3 = params
    # conv1 weight -> block-diagonal (100, 1280): w1_bd[k*K+j, t*C1+c] = (k==t)*W1[c,0,j]
    w1t = W1[:, 0, :].T.astype(jnp.float32)                           # (K, C1)
    eye = jnp.eye(T1, dtype=jnp.float32)
    w1_bd = jnp.einsum('kt,jc->kjtc', eye, w1t).reshape(D1, D2)       # (100, 1280)
    w1_bd = jnp.pad(w1_bd, ((0, D1P - D1), (0, 0)))                   # (128, 1280)
    w1_chunks = w1_bd.reshape(D1P, N_CHUNKS, CCH).transpose(1, 0, 2)  # (5, 128, 256)
    # Each 256-wide chunk covers two taps, so the bias chunk is [b1, b1].
    b1c = jnp.concatenate([b1, b1]).reshape(1, CCH).astype(jnp.float32)
    # conv2 weight -> (tap*in_channel, out_channel): w2f[k*C1+i, o] = W2[o, i, k]
    w2f = jnp.transpose(W2, (2, 1, 0)).reshape(D2, C2).astype(jnp.float32)
    w2_chunks = w2f.reshape(N_CHUNKS, CCH, C2)                        # (5, 256, 256)
    b2r = b2.reshape(1, C2).astype(jnp.float32)
    w3r = W3.reshape(1, C2 * T2).astype(jnp.float32)                  # (1, 256)
    b3r = b3.reshape(1, OUT_DIM).astype(jnp.float32)
    return w1_chunks, b1c, w2_chunks, b2r, w3r, b3r


def network_forward(x, prepared, *, batch_tile=512):
    """x: (B, 1, 100) float32.  prepared: output of prepare_params.  Returns (B, 1)."""
    w1_chunks, b1c, w2_chunks, b2r, w3r, b3r = prepared
    B = x.shape[0]
    if B == 0:
        return jnp.zeros((0, OUT_DIM), jnp.float32)

    # ---- input relayout (per-call, cheap) ----
    x2 = x.reshape(B, D1).astype(jnp.float32)
    x2 = jnp.pad(x2, ((0, 0), (0, D1P - D1)))                 # lane-dense (B, 128)

    # ---- batch tiling: near-equal tiles, minimal zero-row padding, and at
    # least 2 grid steps for medium batches so v7x's two TCs both get work ----
    n_tiles = pl.cdiv(B, batch_tile)
    if n_tiles < 2 and B > 8:
        n_tiles = 2
    TB = _round_up(pl.cdiv(B, n_tiles), 8)
    Bp = _round_up(B, TB)
    if Bp != B:
        x2 = jnp.pad(x2, ((0, Bp - B), (0, 0)))
    grid = (Bp // TB,)

    const2 = lambda i: (0, 0)
    const3 = lambda i: (0, 0, 0)
    resident = pl.Buffered(1)   # weights never change across grid steps

    # Advisory cost: real (non-block-diag-padded) math flops.
    flops = 2 * Bp * (T1 * C1 * K + D2 * C2 + C2)
    bytes_accessed = 4 * (Bp * (D1P + OUT_DIM)
                          + N_CHUNKS * D1P * CCH + CCH
                          + N_CHUNKS * CCH * C2 + C2 + C2 + OUT_DIM)

    out = pl.pallas_call(
        _network_kernel,
        out_shape=jax.ShapeDtypeStruct((Bp, OUT_DIM), jnp.float32),
        grid=grid,
        in_specs=[
            pl.BlockSpec((TB, D1P), lambda i: (i, 0)),                         # x
            pl.BlockSpec((N_CHUNKS, D1P, CCH), const3, pipeline_mode=resident),  # w1
            pl.BlockSpec((1, CCH), const2, pipeline_mode=resident),            # b1
            pl.BlockSpec((N_CHUNKS, CCH, C2), const3, pipeline_mode=resident),  # w2
            pl.BlockSpec((1, C2), const2, pipeline_mode=resident),             # b2
            pl.BlockSpec((1, C2), const2, pipeline_mode=resident),             # w3
            pl.BlockSpec((1, OUT_DIM), const2, pipeline_mode=resident),        # b3
        ],
        out_specs=pl.BlockSpec((TB, OUT_DIM), lambda i: (i, 0)),
        compiler_params=pltpu.CompilerParams(
            dimension_semantics=("parallel",)),
        cost_estimate=pl.CostEstimate(
            flops=flops, transcendentals=0, bytes_accessed=bytes_accessed),
    )(x2, w1_chunks, b1c, w2_chunks, b2r, w3r, b3r)

    return out[:B]


def _init_params(key):
    """Deterministic synthetic parameters with the module's shapes (torch layout)."""
    ks = jax.random.split(key, 6)
    W1 = jax.random.normal(ks[0], (C1, 1, K), jnp.float32) * 0.1     # Conv1d weight
    b1 = jax.random.normal(ks[1], (C1,), jnp.float32) * 0.1
    W2 = jax.random.normal(ks[2], (C2, C1, K), jnp.float32) * 0.05   # Conv1d weight
    b2 = jax.random.normal(ks[3], (C2,), jnp.float32) * 0.1
    W3 = jax.random.normal(ks[4], (OUT_DIM, C2 * T2), jnp.float32) * 0.05  # Linear
    b3 = jax.random.normal(ks[5], (OUT_DIM,), jnp.float32) * 0.1
    return W1, b1, W2, b2, W3, b3


def _reference_forward(x, params):
    """Pure-JAX reference mirroring the PyTorch semantics."""
    W1, b1, W2, b2, W3, b3 = params
    B = x.shape[0]
    patches = x.reshape(B, T1, K)                                   # (B, T1, K)
    h1 = jnp.einsum('bkj,oj->bko', patches, W1[:, 0, :]) + b1       # (B, T1, C1)
    h1 = jnp.maximum(h1, 0.0)
    h2 = jnp.einsum('bki,oik->bo', h1, W2) + b2                     # (B, C2)
    h2 = jnp.maximum(h2, 0.0)
    return h2 @ W3.T + b3                                           # (B, 1)


if __name__ == "__main__":
    key = jax.random.PRNGKey(0)
    k_x, k_x2, k_p = jax.random.split(key, 3)

    params = _init_params(k_p)
    prepared = prepare_params(params)       # one-time weight relayout

    # Small test: B=4 (single grid step).
    B = 4
    x = jax.random.normal(k_x, (B, 1, IN_LEN), jnp.float32)   # NCL, like PyTorch
    out = jax.block_until_ready(network_forward(x, prepared))
    ref = _reference_forward(x, params)
    assert out.shape == (B, OUT_DIM)
    assert jnp.allclose(out, ref, atol=1e-4, rtol=1e-4), (out, ref)

    # Second test: B not a multiple of the tile -> multi-step grid + batch padding.
    B2 = 20
    x2 = jax.random.normal(k_x2, (B2, 1, IN_LEN), jnp.float32)
    out2 = jax.block_until_ready(network_forward(x2, prepared, batch_tile=8))
    ref2 = _reference_forward(x2, params)
    assert out2.shape == (B2, OUT_DIM)
    assert jnp.allclose(out2, ref2, atol=1e-4, rtol=1e-4), (out2, ref2)

    print("KERNEL_OK")
</pallas_src>

<mosaic_0001>
module attributes {stable_mosaic.version = 11 : i64} {
  func.func @_network_kernel(%arg0: i32, %arg1: memref<8x128xf32, #tpu.memory_space<vmem>>, %arg2: memref<5x128x256xf32, #tpu.memory_space<vmem>>, %arg3: memref<1x256xf32, #tpu.memory_space<vmem>>, %arg4: memref<5x256x256xf32, #tpu.memory_space<vmem>>, %arg5: memref<1x256xf32, #tpu.memory_space<vmem>>, %arg6: memref<1x256xf32, #tpu.memory_space<vmem>>, %arg7: memref<1x1xf32, #tpu.memory_space<vmem>>, %arg8: memref<8x1xf32, #tpu.memory_space<vmem>>) attributes {dimension_semantics = [#tpu.dimension_semantics<parallel>], iteration_bounds = array<i64: 1>, scalar_prefetch = 0 : i64, scratch_operands = 0 : i64, tpu.core_type = #tpu.core_type<tc>, window_params = [{transform_indices = @transform_0, window_bounds = array<i64: 8, 128>}, {pipeline_mode = #tpu.pipeline_mode<synchronous>, transform_indices = @transform_1, window_bounds = array<i64: 5, 128, 256>}, {pipeline_mode = #tpu.pipeline_mode<synchronous>, transform_indices = @transform_2, window_bounds = array<i64: 1, 256>}, {pipeline_mode = #tpu.pipeline_mode<synchronous>, transform_indices = @transform_3, window_bounds = array<i64: 5, 256, 256>}, {pipeline_mode = #tpu.pipeline_mode<synchronous>, transform_indices = @transform_4, window_bounds = array<i64: 1, 256>}, {pipeline_mode = #tpu.pipeline_mode<synchronous>, transform_indices = @transform_5, window_bounds = array<i64: 1, 256>}, {pipeline_mode = #tpu.pipeline_mode<synchronous>, transform_indices = @transform_6, window_bounds = array<i64: 1, 1>}, {transform_indices = @transform_7, window_bounds = array<i64: 8, 1>}]} {
    %c0 = arith.constant 0 : index
    %c0_0 = arith.constant 0 : index
    %0 = vector.load %arg1[%c0, %c0_0] : memref<8x128xf32, #tpu.memory_space<vmem>>, vector<8x128xf32>
    %cst = arith.constant 0.000000e+00 : f32
    %1 = vector.broadcast %cst : f32 to vector<8x256xf32>
    %c0_1 = arith.constant 0 : index
    %c0_2 = arith.constant 0 : index
    %2 = vector.load %arg3[%c0_1, %c0_2] : memref<1x256xf32, #tpu.memory_space<vmem>>, vector<1x256xf32>
    %c0_3 = arith.constant 0 : index
    %c0_4 = arith.constant 0 : index
    %c0_5 = arith.constant 0 : index
    %3 = vector.load %arg2[%c0_3, %c0_4, %c0_5] : memref<5x128x256xf32, #tpu.memory_space<vmem>>, vector<1x128x256xf32>
    %4 = vector.shape_cast %3 : vector<1x128x256xf32> to vector<128x256xf32>
    %cst_6 = arith.constant dense<0.000000e+00> : vector<8x256xf32>
    %5 = tpu.matmul %0, %4, %cst_6 {dimension_numbers = #tpu.dot_dimension_numbers<[1], [0], [0], [1], [0, 0, 1, 1], [], []>} : vector<8x128xf32>, vector<128x256xf32>, vector<8x256xf32> -> vector<8x256xf32>
    %6 = vector.broadcast %2 : vector<1x256xf32> to vector<8x256xf32>
    %7 = arith.addf %5, %6 : vector<8x256xf32>
    %cst_7 = arith.constant 0.000000e+00 : f32
    %8 = vector.broadcast %cst_7 : f32 to vector<8x256xf32>
    %9 = arith.maximumf %7, %8 : vector<8x256xf32>
    %c0_8 = arith.constant 0 : index
    %c0_9 = arith.constant 0 : index
    %c0_10 = arith.constant 0 : index
    %10 = vector.load %arg4[%c0_8, %c0_9, %c0_10] : memref<5x256x256xf32, #tpu.memory_space<vmem>>, vector<1x256x256xf32>
    %11 = vector.shape_cast %10 : vector<1x256x256xf32> to vector<256x256xf32>
    %cst_11 = arith.constant dense<0.000000e+00> : vector<8x256xf32>
    %12 = tpu.matmul %9, %11, %cst_11 {dimension_numbers = #tpu.dot_dimension_numbers<[1], [0], [0], [1], [0, 0, 1, 1], [], []>} : vector<8x256xf32>, vector<256x256xf32>, vector<8x256xf32> -> vector<8x256xf32>
    %13 = arith.addf %1, %12 : vector<8x256xf32>
    %c1 = arith.constant 1 : index
    %c0_12 = arith.constant 0 : index
    %c0_13 = arith.constant 0 : index
    %14 = vector.load %arg2[%c1, %c0_12, %c0_13] : memref<5x128x256xf32, #tpu.memory_space<vmem>>, vector<1x128x256xf32>
    %15 = vector.shape_cast %14 : vector<1x128x256xf32> to vector<128x256xf32>
    %cst_14 = arith.constant dense<0.000000e+00> : vector<8x256xf32>
    %16 = tpu.matmul %0, %15, %cst_14 {dimension_numbers = #tpu.dot_dimension_numbers<[1], [0], [0], [1], [0, 0, 1, 1], [], []>} : vector<8x128xf32>, vector<128x256xf32>, vector<8x256xf32> -> vector<8x256xf32>
    %17 = vector.broadcast %2 : vector<1x256xf32> to vector<8x256xf32>
    %18 = arith.addf %16, %17 : vector<8x256xf32>
    %cst_15 = arith.constant 0.000000e+00 : f32
    %19 = vector.broadcast %cst_15 : f32 to vector<8x256xf32>
    %20 = arith.maximumf %18, %19 : vector<8x256xf32>
    %c1_16 = arith.constant 1 : index
    %c0_17 = arith.constant 0 : index
    %c0_18 = arith.constant 0 : index
    %21 = vector.load %arg4[%c1_16, %c0_17, %c0_18] : memref<5x256x256xf32, #tpu.memory_space<vmem>>, vector<1x256x256xf32>
    %22 = vector.shape_cast %21 : vector<1x256x256xf32> to vector<256x256xf32>
    %cst_19 = arith.constant dense<0.000000e+00> : vector<8x256xf32>
    %23 = tpu.matmul %20, %22, %cst_19 {dimension_numbers = #tpu.dot_dimension_numbers<[1], [0], [0], [1], [0, 0, 1, 1], [], []>} : vector<8x256xf32>, vector<256x256xf32>, vector<8x256xf32> -> vector<8x256xf32>
    %24 = arith.addf %13, %23 : vector<8x256xf32>
    %c2 = arith.constant 2 : index
    %c0_20 = arith.constant 0 : index
    %c0_21 = arith.constant 0 : index
    %25 = vector.load %arg2[%c2, %c0_20, %c0_21] : memref<5x128x256xf32, #tpu.memory_space<vmem>>, vector<1x128x256xf32>
    %26 = vector.shape_cast %25 : vector<1x128x256xf32> to vector<128x256xf32>
    %cst_22 = arith.constant dense<0.000000e+00> : vector<8x256xf32>
    %27 = tpu.matmul %0, %26, %cst_22 {dimension_numbers = #tpu.dot_dimension_numbers<[1], [0], [0], [1], [0, 0, 1, 1], [], []>} : vector<8x128xf32>, vector<128x256xf32>, vector<8x256xf32> -> vector<8x256xf32>
    %28 = vector.broadcast %2 : vector<1x256xf32> to vector<8x256xf32>
    %29 = arith.addf %27, %28 : vector<8x256xf32>
    %cst_23 = arith.constant 0.000000e+00 : f32
    %30 = vector.broadcast %cst_23 : f32 to vector<8x256xf32>
    %31 = arith.maximumf %29, %30 : vector<8x256xf32>
    %c2_24 = arith.constant 2 : index
    %c0_25 = arith.constant 0 : index
    %c0_26 = arith.constant 0 : index
    %32 = vector.load %arg4[%c2_24, %c0_25, %c0_26] : memref<5x256x256xf32, #tpu.memory_space<vmem>>, vector<1x256x256xf32>
    %33 = vector.shape_cast %32 : vector<1x256x256xf32> to vector<256x256xf32>
    %cst_27 = arith.constant dense<0.000000e+00> : vector<8x256xf32>
    %34 = tpu.matmul %31, %33, %cst_27 {dimension_numbers = #tpu.dot_dimension_numbers<[1], [0], [0], [1], [0, 0, 1, 1], [], []>} : vector<8x256xf32>, vector<256x256xf32>, vector<8x256xf32> -> vector<8x256xf32>
    %35 = arith.addf %24, %34 : vector<8x256xf32>
    %c3 = arith.constant 3 : index
    %c0_28 = arith.constant 0 : index
    %c0_29 = arith.constant 0 : index
    %36 = vector.load %arg2[%c3, %c0_28, %c0_29] : memref<5x128x256xf32, #tpu.memory_space<vmem>>, vector<1x128x256xf32>
    %37 = vector.shape_cast %36 : vector<1x128x256xf32> to vector<128x256xf32>
    %cst_30 = arith.constant dense<0.000000e+00> : vector<8x256xf32>
    %38 = tpu.matmul %0, %37, %cst_30 {dimension_numbers = #tpu.dot_dimension_numbers<[1], [0], [0], [1], [0, 0, 1, 1], [], []>} : vector<8x128xf32>, vector<128x256xf32>, vector<8x256xf32> -> vector<8x256xf32>
    %39 = vector.broadcast %2 : vector<1x256xf32> to vector<8x256xf32>
    %40 = arith.addf %38, %39 : vector<8x256xf32>
    %cst_31 = arith.constant 0.000000e+00 : f32
    %41 = vector.broadcast %cst_31 : f32 to vector<8x256xf32>
    %42 = arith.maximumf %40, %41 : vector<8x256xf32>
    %c3_32 = arith.constant 3 : index
    %c0_33 = arith.constant 0 : index
    %c0_34 = arith.constant 0 : index
    %43 = vector.load %arg4[%c3_32, %c0_33, %c0_34] : memref<5x256x256xf32, #tpu.memory_space<vmem>>, vector<1x256x256xf32>
    %44 = vector.shape_cast %43 : vector<1x256x256xf32> to vector<256x256xf32>
    %cst_35 = arith.constant dense<0.000000e+00> : vector<8x256xf32>
    %45 = tpu.matmul %42, %44, %cst_35 {dimension_numbers = #tpu.dot_dimension_numbers<[1], [0], [0], [1], [0, 0, 1, 1], [], []>} : vector<8x256xf32>, vector<256x256xf32>, vector<8x256xf32> -> vector<8x256xf32>
    %46 = arith.addf %35, %45 : vector<8x256xf32>
    %c4 = arith.constant 4 : index
    %c0_36 = arith.constant 0 : index
    %c0_37 = arith.constant 0 : index
    %47 = vector.load %arg2[%c4, %c0_36, %c0_37] : memref<5x128x256xf32, #tpu.memory_space<vmem>>, vector<1x128x256xf32>
    %48 = vector.shape_cast %47 : vector<1x128x256xf32> to vector<128x256xf32>
    %cst_38 = arith.constant dense<0.000000e+00> : vector<8x256xf32>
    %49 = tpu.matmul %0, %48, %cst_38 {dimension_numbers = #tpu.dot_dimension_numbers<[1], [0], [0], [1], [0, 0, 1, 1], [], []>} : vector<8x128xf32>, vector<128x256xf32>, vector<8x256xf32> -> vector<8x256xf32>
    %50 = vector.broadcast %2 : vector<1x256xf32> to vector<8x256xf32>
    %51 = arith.addf %49, %50 : vector<8x256xf32>
    %cst_39 = arith.constant 0.000000e+00 : f32
    %52 = vector.broadcast %cst_39 : f32 to vector<8x256xf32>
    %53 = arith.maximumf %51, %52 : vector<8x256xf32>
    %c4_40 = arith.constant 4 : index
    %c0_41 = arith.constant 0 : index
    %c0_42 = arith.constant 0 : index
    %54 = vector.load %arg4[%c4_40, %c0_41, %c0_42] : memref<5x256x256xf32, #tpu.memory_space<vmem>>, vector<1x256x256xf32>
    %55 = vector.shape_cast %54 : vector<1x256x256xf32> to vector<256x256xf32>
    %cst_43 = arith.constant dense<0.000000e+00> : vector<8x256xf32>
    %56 = tpu.matmul %53, %55, %cst_43 {dimension_numbers = #tpu.dot_dimension_numbers<[1], [0], [0], [1], [0, 0, 1, 1], [], []>} : vector<8x256xf32>, vector<256x256xf32>, vector<8x256xf32> -> vector<8x256xf32>
    %57 = arith.addf %46, %56 : vector<8x256xf32>
    %c0_44 = arith.constant 0 : index
    %c0_45 = arith.constant 0 : index
    %58 = vector.load %arg5[%c0_44, %c0_45] : memref<1x256xf32, #tpu.memory_space<vmem>>, vector<1x256xf32>
    %59 = vector.broadcast %58 : vector<1x256xf32> to vector<8x256xf32>
    %60 = arith.addf %57, %59 : vector<8x256xf32>
    %cst_46 = arith.constant 0.000000e+00 : f32
    %61 = vector.broadcast %cst_46 : f32 to vector<8x256xf32>
    %62 = arith.maximumf %60, %61 : vector<8x256xf32>
    %c0_47 = arith.constant 0 : index
    %c0_48 = arith.constant 0 : index
    %63 = vector.load %arg6[%c0_47, %c0_48] : memref<1x256xf32, #tpu.memory_space<vmem>>, vector<1x256xf32>
    %64 = vector.broadcast %63 : vector<1x256xf32> to vector<8x256xf32>
    %65 = arith.mulf %62, %64 : vector<8x256xf32>
    %cst_49 = arith.constant dense<0.000000e+00> : vector<8xf32>
    %66 = vector.multi_reduction <add>, %65, %cst_49 [1] : vector<8x256xf32> to vector<8xf32>
    %67 = vector.shape_cast %66 : vector<8xf32> to vector<8x1xf32>
    %c0_50 = arith.constant 0 : index
    %c0_51 = arith.constant 0 : index
    %68 = vector.load %arg7[%c0_50, %c0_51] : memref<1x1xf32, #tpu.memory_space<vmem>>, vector<1x1xf32>
    %69 = vector.broadcast %68 : vector<1x1xf32> to vector<8x1xf32>
    %70 = arith.addf %67, %69 : vector<8x1xf32>
    %c0_52 = arith.constant 0 : index
    %c0_53 = arith.constant 0 : index
    %71 = vector.load %arg8[%c0_52, %c0_53] : memref<8x1xf32, #tpu.memory_space<vmem>>, vector<8x1xf32>
    tpu.vector_store %arg8[%c0_52, %c0_53], %70 {strides = array<i32>} : memref<8x1xf32, #tpu.memory_space<vmem>>, vector<8x1xf32>,
    return
  }
  func.func @transform_0(%arg0: i32) -> (i32, i32) {
    %c0_i32 = arith.constant 0 : i32
    %c0_i32_0 = arith.constant 0 : i32
    return %arg0, %c0_i32 : i32, i32
  }
  func.func @transform_1(%arg0: i32) -> (i32, i32, i32) {
    %c0_i32 = arith.constant 0 : i32
    %c0_i32_0 = arith.constant 0 : i32
    %c0_i32_1 = arith.constant 0 : i32
    %c0_i32_2 = arith.constant 0 : i32
    return %c0_i32, %c0_i32_0, %c0_i32_1 : i32, i32, i32
  }
  func.func @transform_2(%arg0: i32) -> (i32, i32) {
    %c0_i32 = arith.constant 0 : i32
    %c0_i32_0 = arith.constant 0 : i32
    %c0_i32_1 = arith.constant 0 : i32
    return %c0_i32, %c0_i32_0 : i32, i32
  }
  func.func @transform_3(%arg0: i32) -> (i32, i32, i32) {
    %c0_i32 = arith.constant 0 : i32
    %c0_i32_0 = arith.constant 0 : i32
    %c0_i32_1 = arith.constant 0 : i32
    %c0_i32_2 = arith.constant 0 : i32
    return %c0_i32, %c0_i32_0, %c0_i32_1 : i32, i32, i32
  }
  func.func @transform_4(%arg0: i32) -> (i32, i32) {
    %c0_i32 = arith.constant 0 : i32
    %c0_i32_0 = arith.constant 0 : i32
    %c0_i32_1 = arith.constant 0 : i32
    return %c0_i32, %c0_i32_0 : i32, i32
  }
  func.func @transform_5(%arg0: i32) -> (i32, i32) {
    %c0_i32 = arith.constant 0 : i32
    %c0_i32_0 = arith.constant 0 : i32
    %c0_i32_1 = arith.constant 0 : i32
    return %c0_i32, %c0_i32_0 : i32, i32
  }
  func.func @transform_6(%arg0: i32) -> (i32, i32) {
    %c0_i32 = arith.constant 0 : i32
    %c0_i32_0 = arith.constant 0 : i32
    %c0_i32_1 = arith.constant 0 : i32
    return %c0_i32, %c0_i32_0 : i32, i32
  }
  func.func @transform_7(%arg0: i32) -> (i32, i32) {
    %c0_i32 = arith.constant 0 : i32
    %c0_i32_0 = arith.constant 0 : i32
    return %arg0, %c0_i32 : i32, i32
  }
}

</mosaic_0001>

<llo_original>
// kernel: tpu_custom_call.1
$region0: #{tpu_custom_call.1}
  #allocation0 [shape = 'u32[]', space=smem, size = 0x4, offset = 0x4, fixed_abs, tag = 'smem constant byte address 0x4 - core index']
  #allocation1 [shape = 'u32[144,128]{1,0:T(1,128)}', space=vmem, size = 0x12000, scoped, tag = 'internal scratch']
  #allocation2 [shape = 'f32[1,1]{1,0:T(1,128)S(1)}', space=vmem, size = 0x200, scoped, tag = 'scoped memory for tpu_custom_call.1']
  %s0 = inlined_call_operand.hbm [shape: f32[8,128], index: 0, kind: input, shape index: {}]
  %s1 = inlined_call_operand.hbm [shape: f32[5,128,256], index: 1, kind: input, shape index: {}]
  %s2 = inlined_call_operand.hbm [shape: f32[1,256], index: 2, kind: input, shape index: {}]
  %s3 = inlined_call_operand.hbm [shape: f32[5,256,256], index: 3, kind: input, shape index: {}]
  %s4 = inlined_call_operand.hbm [shape: f32[1,256], index: 4, kind: input, shape index: {}]
  %s5 = inlined_call_operand.hbm [shape: f32[1,256], index: 5, kind: input, shape index: {}]
  %s6 = inlined_call_operand.<no memory space> [shape: f32[1,1], index: 6, kind: input, shape index: {}]
  %s7 = inlined_call_operand.vmem [shape: f32[8,1], index: 7, kind: output, shape index: {}]
  %s8 = sld [smem:[#allocation0]]
  $region62: #{tpu_custom_call.1} parent=0
    _
  %s10 = ssub.s32 1, %s8
  %s11 = scalar_select 0, %s10, %s8
  %v12 = vstv %s6
  %13 = vst [vmem:[#allocation2] sm:$0x1] %v12
  $region1: #{tpu_custom_call.1} parent=0
    #allocation3 [shape = 'u8[4096]{0}', space=vmem, size = 0x1000, scoped, tag = 'input window, operand 0, single buffered']
    #allocation4 [shape = 's32[1]{0}', space=sflag, size = 0x4, scoped, tag = 'scoped memory for tpu_custom_call.1']
    #allocation5 [shape = 'u8[655360]{0}', space=vmem, size = 0xa0000, scoped, tag = 'input window, operand 1, single buffered']
    #allocation6 [shape = 's32[1]{0}', space=sflag, size = 0x4, scoped, tag = 'scoped memory for tpu_custom_call.1']
    #allocation7 [shape = 'u8[1024]{0}', space=vmem, size = 0x400, scoped, tag = 'input window, operand 2, single buffered']
    #allocation8 [shape = 'u8[1310720]{0}', space=vmem, size = 0x140000, scoped, tag = 'input window, operand 3, single buffered']
    #allocation9 [shape = 's32[1]{0}', space=sflag, size = 0x4, scoped, tag = 'scoped memory for tpu_custom_call.1']
    #allocation10 [shape = 'u8[1024]{0}', space=vmem, size = 0x400, scoped, tag = 'input window, operand 4, single buffered']
    #allocation11 [shape = 'u8[1024]{0}', space=vmem, size = 0x400, scoped, tag = 'input window, operand 5, single buffered']
    #allocation12 [shape = 's32[1]{0}', space=sflag, size = 0x4, scoped, tag = 'scoped memory for tpu_custom_call.1']
    %14 = vsyncpa [#allocation4], 0
    %15 = vsyncpa [#allocation6], 0
    %16 = vsyncpa [#allocation9], 0
    %17 = vsyncpa [#allocation12], 0
    // Predicated region
    $region2: #{tpu_custom_call.1} parent=1 // pred_check
      _
    $region3: #{tpu_custom_call.1} parent=1 // pred_check_branch
      %19 = sbr.rel (0) target = $region5
    $region4: #{tpu_custom_call.1} parent=1 // pred_region
      %s21 = ssub.s32 128, 128
      %22 = vsyncadd [#allocation4], %s21
      %s24 = sshll.u32 [#allocation3], 4
      %s25 = int_to_ptr.vmem [resolvable:$true] %s24
      %27 = dma.hbm_to_vmem [thread:$0]  %s0, 128, %s25, [#allocation4]
    $region5: #{tpu_custom_call.1} parent=1 // pred_fallthru
      _
    // Predicated region
    $region6: #{tpu_custom_call.1} parent=1 // pred_check
      _
    $region7: #{tpu_custom_call.1} parent=1 // pred_check_branch
      %29 = sbr.rel (0) target = $region9
    $region8: #{tpu_custom_call.1} parent=1 // pred_region
      %s31 = ssub.s32 20480, 20480
      %32 = vsyncadd [#allocation6], %s31
      %s33 = sshll.u32 [#allocation5], 4
      %s34 = int_to_ptr.vmem [resolvable:$true] %s33
      %39 = dma.hbm_to_vmem [thread:$0]  %s1, 20480, %s34, [#allocation6], 256, 256, 16
    $region9: #{tpu_custom_call.1} parent=1 // pred_fallthru
      _
    // Predicated region
    $region10: #{tpu_custom_call.1} parent=1 // pred_check
      _
    $region11: #{tpu_custom_call.1} parent=1 // pred_check_branch
      %41 = sbr.rel (0) target = $region13
    $region12: #{tpu_custom_call.1} parent=1 // pred_region
      %s43 = ssub.s32 32, 32
      %44 = vsyncadd [#allocation6], %s43
      %s46 = sshll.u32 [#allocation7], 4
      %s47 = int_to_ptr.vmem [resolvable:$true] %s46
      %49 = dma.hbm_to_vmem [thread:$0]  %s2, 32, %s47, [#allocation6]
    $region13: #{tpu_custom_call.1} parent=1 // pred_fallthru
      _
    // Predicated region
    $region14: #{tpu_custom_call.1} parent=1 // pred_check
      _
    $region15: #{tpu_custom_call.1} parent=1 // pred_check_branch
      %51 = sbr.rel (0) target = $region17
    $region16: #{tpu_custom_call.1} parent=1 // pred_region
      %s53 = ssub.s32 40960, 40960
      %54 = vsyncadd [#allocation9], %s53
      %s55 = sshll.u32 [#allocation8], 4
      %s56 = int_to_ptr.vmem [resolvable:$true] %s55
      %61 = dma.hbm_to_vmem [thread:$0]  %s3, 40960, %s56, [#allocation9], 256, 256, 16
    $region17: #{tpu_custom_call.1} parent=1 // pred_fallthru
      _
    // Predicated region
    $region18: #{tpu_custom_call.1} parent=1 // pred_check
      _
    $region19: #{tpu_custom_call.1} parent=1 // pred_check_branch
      %63 = sbr.rel (0) target = $region21
    $region20: #{tpu_custom_call.1} parent=1 // pred_region
      %s65 = ssub.s32 32, 32
      %66 = vsyncadd [#allocation9], %s65
      %s68 = sshll.u32 [#allocation10], 4
      %s69 = int_to_ptr.vmem [resolvable:$true] %s68
      %71 = dma.hbm_to_vmem [thread:$0]  %s4, 32, %s69, [#allocation9]
    $region21: #{tpu_custom_call.1} parent=1 // pred_fallthru
      _
    // Predicated region
    $region22: #{tpu_custom_call.1} parent=1 // pred_check
      _
    $region23: #{tpu_custom_call.1} parent=1 // pred_check_branch
      %73 = sbr.rel (0) target = $region25
    $region24: #{tpu_custom_call.1} parent=1 // pred_region
      %s75 = ssub.s32 32, 32
      %76 = vsyncadd [#allocation12], %s75
      %s78 = sshll.u32 [#allocation11], 4
      %s79 = int_to_ptr.vmem [resolvable:$true] %s78
      %81 = dma.hbm_to_vmem [thread:$0]  %s5, 32, %s79, [#allocation12]
    $region25: #{tpu_custom_call.1} parent=1 // pred_fallthru
      _
    // Predicated region
    $region26: #{tpu_custom_call.1} parent=1 // pred_check
      _
    $region27: #{tpu_custom_call.1} parent=1 // pred_check_branch
      %83 = sbr.rel (0) target = $region29
    $region28: #{tpu_custom_call.1} parent=1 // pred_region
      _
    $region29: #{tpu_custom_call.1} parent=1 // pred_fallthru
      _
    // Predicated region
    $region30: #{tpu_custom_call.1} parent=1 // pred_check
      _
    $region31: #{tpu_custom_call.1} parent=1 // pred_check_branch
      %85 = sbr.rel (0) target = $region33
    $region32: #{tpu_custom_call.1} parent=1 // pred_region
      %86 = dma.done [#allocation4], 128
    $region33: #{tpu_custom_call.1} parent=1 // pred_fallthru
      _
    // Predicated region
    $region34: #{tpu_custom_call.1} parent=1 // pred_check
      _
    $region35: #{tpu_custom_call.1} parent=1 // pred_check_branch
      %88 = sbr.rel (0) target = $region37
    $region36: #{tpu_custom_call.1} parent=1 // pred_region
      %89 = dma.done [#allocation6], 20480
    $region37: #{tpu_custom_call.1} parent=1 // pred_fallthru
      _
    // Predicated region
    $region38: #{tpu_custom_call.1} parent=1 // pred_check
      _
    $region39: #{tpu_custom_call.1} parent=1 // pred_check_branch
      %91 = sbr.rel (0) target = $region41
    $region40: #{tpu_custom_call.1} parent=1 // pred_region
      %92 = dma.done [#allocation6], 32
    $region41: #{tpu_custom_call.1} parent=1 // pred_fallthru
      _
    // Predicated region
    $region42: #{tpu_custom_call.1} parent=1 // pred_check
      _
    $region43: #{tpu_custom_call.1} parent=1 // pred_check_branch
      %94 = sbr.rel (0) target = $region45
    $region44: #{tpu_custom_call.1} parent=1 // pred_region
      %95 = dma.done [#allocation9], 40960
    $region45: #{tpu_custom_call.1} parent=1 // pred_fallthru
      _
    // Predicated region
    $region46: #{tpu_custom_call.1} parent=1 // pred_check
      _
    $region47: #{tpu_custom_call.1} parent=1 // pred_check_branch
      %97 = sbr.rel (0) target = $region49
    $region48: #{tpu_custom_call.1} parent=1 // pred_region
      %98 = dma.done [#allocation9], 32
    $region49: #{tpu_custom_call.1} parent=1 // pred_fallthru
      _
    // Predicated region
    $region50: #{tpu_custom_call.1} parent=1 // pred_check
      _
    $region51: #{tpu_custom_call.1} parent=1 // pred_check_branch
      %100 = sbr.rel (0) target = $region53
    $region52: #{tpu_custom_call.1} parent=1 // pred_region
      %101 = dma.done [#allocation12], 32
    $region53: #{tpu_custom_call.1} parent=1 // pred_fallthru
      _
    %v102 = vld [vmem:[#allocation3] sm:$0xff]
    %v103 = vld [vmem:[#allocation7] sm:$0x3]
    %v104 = vld [vmem:[#allocation5] sm:$0xff]
    %v105 = vld [vmem:[#allocation5 + $0x8] sm:$0xff]
    %v106 = vld [vmem:[#allocation5 + $0x10] sm:$0xff]
    %v107 = vld [vmem:[#allocation5 + $0x18] sm:$0xff]
    %v108 = vld [vmem:[#allocation5 + $0x20] sm:$0xff]
    %v109 = vld [vmem:[#allocation5 + $0x28] sm:$0xff]
    %v110 = vld [vmem:[#allocation5 + $0x30] sm:$0xff]
    %v111 = vld [vmem:[#allocation5 + $0x38] sm:$0xff]
    %v112 = vld [vmem:[#allocation5 + $0x40] sm:$0xff]
    %v113 = vld [vmem:[#allocation5 + $0x48] sm:$0xff]
    %v114 = vld [vmem:[#allocation5 + $0x50] sm:$0xff]
    %v115 = vld [vmem:[#allocation5 + $0x58] sm:$0xff]
    %v116 = vld [vmem:[#allocation5 + $0x60] sm:$0xff]
    %v117 = vld [vmem:[#allocation5 + $0x68] sm:$0xff]
    %v118 = vld [vmem:[#allocation5 + $0x70] sm:$0xff]
    %v119 = vld [vmem:[#allocation5 + $0x78] sm:$0xff]
    %v120 = vld [vmem:[#allocation5 + $0x80] sm:$0xff]
    %v121 = vld [vmem:[#allocation5 + $0x88] sm:$0xff]
    %v122 = vld [vmem:[#allocation5 + $0x90] sm:$0xff]
    %v123 = vld [vmem:[#allocation5 + $0x98] sm:$0xff]
    %v124 = vld [vmem:[#allocation5 + $0xa0] sm:$0xff]
    %v125 = vld [vmem:[#allocation5 + $0xa8] sm:$0xff]
    %v126 = vld [vmem:[#allocation5 + $0xb0] sm:$0xff]
    %v127 = vld [vmem:[#allocation5 + $0xb8] sm:$0xff]
    %v128 = vld [vmem:[#allocation5 + $0xc0] sm:$0xff]
    %v129 = vld [vmem:[#allocation5 + $0xc8] sm:$0xff]
    %v130 = vld [vmem:[#allocation5 + $0xd0] sm:$0xff]
    %v131 = vld [vmem:[#allocation5 + $0xd8] sm:$0xff]
    %v132 = vld [vmem:[#allocation5 + $0xe0] sm:$0xff]
    %v133 = vld [vmem:[#allocation5 + $0xe8] sm:$0xff]
    %v134 = vld [vmem:[#allocation5 + $0xf0] sm:$0xff]
    %v135 = vld [vmem:[#allocation5 + $0xf8] sm:$0xff]
    %v137 = vlaneseq
    %v138 = vshrl.u32 %v137, 7
    %v139 = vsub.s32 0, %v138
    %v140 = vrot.slane %v103, %v139
    %v141 = vlaneseq
    %v142 = vshrl.u32 %v141, 7
    %v143 = vsub.s32 1, %v142
    %v144 = vrot.slane %v103, %v143
    %147 = vmatprep.subr.mxu0 %v105
    %148 = vmatpush1.msra.mxu0 %v104
    %149 = vmatprep.subr.mxu0 %v107
    %150 = vmatpush1.msra.mxu0 %v106
    %151 = vmatprep.subr.mxu0 %v109
    %152 = vmatpush1.msra.mxu0 %v108
    %153 = vmatprep.subr.mxu0 %v111
    %154 = vmatpush1.msra.mxu0 %v110
    %155 = vmatprep.subr.mxu0 %v113
    %156 = vmatpush1.msra.mxu0 %v112
    %157 = vmatprep.subr.mxu0 %v115
    %158 = vmatpush1.msra.mxu0 %v114
    %159 = vmatprep.subr.mxu0 %v117
    %160 = vmatpush1.msra.mxu0 %v116
    %161 = vmatprep.subr.mxu0 %v119
    %162 = vmatpush1.msra.mxu0 %v118
    %163 = vmatprep.subr.mxu0 %v121
    %164 = vmatpush1.msra.mxu0 %v120
    %165 = vmatprep.subr.mxu0 %v123
    %166 = vmatpush1.msra.mxu0 %v122
    %167 = vmatprep.subr.mxu0 %v125
    %168 = vmatpush1.msra.mxu0 %v124
    %169 = vmatprep.subr.mxu0 %v127
    %170 = vmatpush1.msra.mxu0 %v126
    %171 = vmatprep.subr.mxu0 %v129
    %172 = vmatpush1.msra.mxu0 %v128
    %173 = vmatprep.subr.mxu0 %v131
    %174 = vmatpush1.msra.mxu0 %v130
    %175 = vmatprep.subr.mxu0 %v133
    %176 = vmatpush1.msra.mxu0 %v132
    %177 = vmatprep.subr.mxu0 %v135
    %178 = vmatpush1.msra.mxu0 %v134
    %179 = vmatprep.subr.mxu0 0.0
    %180 = vmatpush1.msra.mxu0 0.0
    %181 = vmatprep.subr.mxu0 0.0
    %182 = vmatpush1.msra.mxu0 0.0
    %183 = vmatprep.subr.mxu0 0.0
    %184 = vmatpush1.msra.mxu0 0.0
    %185 = vmatprep.subr.mxu0 0.0
    %186 = vmatpush1.msra.mxu0 0.0
    %187 = vmatprep.subr.mxu0 0.0
    %188 = vmatpush1.msra.mxu0 0.0
    %189 = vmatprep.subr.mxu0 0.0
    %190 = vmatpush1.msra.mxu0 0.0
    %191 = vmatprep.subr.mxu0 0.0
    %192 = vmatpush1.msra.mxu0 0.0
    %193 = vmatprep.subr.mxu0 0.0
    %194 = vmatpush1.msra.mxu0 0.0
    %195 = vmatprep.subr.mxu0 0.0
    %196 = vmatpush1.msra.mxu0 0.0
    %197 = vmatprep.subr.mxu0 0.0
    %198 = vmatpush1.msra.mxu0 0.0
    %199 = vmatprep.subr.mxu0 0.0
    %200 = vmatpush1.msra.mxu0 0.0
    %201 = vmatprep.subr.mxu0 0.0
    %202 = vmatpush1.msra.mxu0 0.0
    %203 = vmatprep.subr.mxu0 0.0
    %204 = vmatpush1.msra.mxu0 0.0
    %205 = vmatprep.subr.mxu0 0.0
    %206 = vmatpush1.msra.mxu0 0.0
    %207 = vmatprep.subr.mxu0 0.0
    %208 = vmatpush1.msra.mxu0 0.0
    %209 = vmatprep.subr.mxu0 0.0
    %210 = vmatpush1.msra.mxu0 0.0
    %211 = vmatprep.mubr.f32.mxu0 0.0
    %212 = vmatmul.mubr.f32.gmra.mrb[0].mxu0 %v102
    %v213 = vpop.f32.mrb[0].mxu0
    %v214 = vadd.f32 %v140, %v213
    %v215 = vpop.f32.mrb[0].mxu0
    %v216 = vadd.f32 %v144, %v215
    %217 = vdwg.mxu0
    %v218 = vmax.f32 %v214, 0.0
    %v219 = vmax.f32 %v216, 0.0
    %v220 = vld [vmem:[#allocation8] sm:$0xff]
    %v221 = vld [vmem:[#allocation8 + $0x8] sm:$0xff]
    %v222 = vld [vmem:[#allocation8 + $0x10] sm:$0xff]
    %v223 = vld [vmem:[#allocation8 + $0x18] sm:$0xff]
    %v224 = vld [vmem:[#allocation8 + $0x20] sm:$0xff]
    %v225 = vld [vmem:[#allocation8 + $0x28] sm:$0xff]
    %v226 = vld [vmem:[#allocation8 + $0x30] sm:$0xff]
    %v227 = vld [vmem:[#allocation8 + $0x38] sm:$0xff]
    %v228 = vld [vmem:[#allocation8 + $0x40] sm:$0xff]
    %v229 = vld [vmem:[#allocation8 + $0x48] sm:$0xff]
    %v230 = vld [vmem:[#allocation8 + $0x50] sm:$0xff]
    %v231 = vld [vmem:[#allocation8 + $0x58] sm:$0xff]
    %v232 = vld [vmem:[#allocation8 + $0x60] sm:$0xff]
    %v233 = vld [vmem:[#allocation8 + $0x68] sm:$0xff]
    %v234 = vld [vmem:[#allocation8 + $0x70] sm:$0xff]
    %v235 = vld [vmem:[#allocation8 + $0x78] sm:$0xff]
    %v236 = vld [vmem:[#allocation8 + $0x80] sm:$0xff]
    %v237 = vld [vmem:[#allocation8 + $0x88] sm:$0xff]
    %v238 = vld [vmem:[#allocation8 + $0x90] sm:$0xff]
    %v239 = vld [vmem:[#allocation8 + $0x98] sm:$0xff]
    %v240 = vld [vmem:[#allocation8 + $0xa0] sm:$0xff]
    %v241 = vld [vmem:[#allocation8 + $0xa8] sm:$0xff]
    %v242 = vld [vmem:[#allocation8 + $0xb0] sm:$0xff]
    %v243 = vld [vmem:[#allocation8 + $0xb8] sm:$0xff]
    %v244 = vld [vmem:[#allocation8 + $0xc0] sm:$0xff]
    %v245 = vld [vmem:[#allocation8 + $0xc8] sm:$0xff]
    %v246 = vld [vmem:[#allocation8 + $0xd0] sm:$0xff]
    %v247 = vld [vmem:[#allocation8 + $0xd8] sm:$0xff]
    %v248 = vld [vmem:[#allocation8 + $0xe0] sm:$0xff]
    %v249 = vld [vmem:[#allocation8 + $0xe8] sm:$0xff]
    %v250 = vld [vmem:[#allocation8 + $0xf0] sm:$0xff]
    %v251 = vld [vmem:[#allocation8 + $0xf8] sm:$0xff]
    %v252 = vld [vmem:[#allocation8 + $0x100] sm:$0xff]
    %v253 = vld [vmem:[#allocation8 + $0x108] sm:$0xff]
    %v254 = vld [vmem:[#allocation8 + $0x110] sm:$0xff]
    %v255 = vld [vmem:[#allocation8 + $0x118] sm:$0xff]
    %v256 = vld [vmem:[#allocation8 + $0x120] sm:$0xff]
    %v257 = vld [vmem:[#allocation8 + $0x128] sm:$0xff]
    %v258 = vld [vmem:[#allocation8 + $0x130] sm:$0xff]
    %v259 = vld [vmem:[#allocation8 + $0x138] sm:$0xff]
    %v260 = vld [vmem:[#allocation8 + $0x140] sm:$0xff]
    %v261 = vld [vmem:[#allocation8 + $0x148] sm:$0xff]
    %v262 = vld [vmem:[#allocation8 + $0x150] sm:$0xff]
    %v263 = vld [vmem:[#allocation8 + $0x158] sm:$0xff]
    %v264 = vld [vmem:[#allocation8 + $0x160] sm:$0xff]
    %v265 = vld [vmem:[#allocation8 + $0x168] sm:$0xff]
    %v266 = vld [vmem:[#allocation8 + $0x170] sm:$0xff]
    %v267 = vld [vmem:[#allocation8 + $0x178] sm:$0xff]
    %v268 = vld [vmem:[#allocation8 + $0x180] sm:$0xff]
    %v269 = vld [vmem:[#allocation8 + $0x188] sm:$0xff]
    %v270 = vld [vmem:[#allocation8 + $0x190] sm:$0xff]
    %v271 = vld [vmem:[#allocation8 + $0x198] sm:$0xff]
    %v272 = vld [vmem:[#allocation8 + $0x1a0] sm:$0xff]
    %v273 = vld [vmem:[#allocation8 + $0x1a8] sm:$0xff]
    %v274 = vld [vmem:[#allocation8 + $0x1b0] sm:$0xff]
    %v275 = vld [vmem:[#allocation8 + $0x1b8] sm:$0xff]
    %v276 = vld [vmem:[#allocation8 + $0x1c0] sm:$0xff]
    %v277 = vld [vmem:[#allocation8 + $0x1c8] sm:$0xff]
    %v278 = vld [vmem:[#allocation8 + $0x1d0] sm:$0xff]
    %v279 = vld [vmem:[#allocation8 + $0x1d8] sm:$0xff]
    %v280 = vld [vmem:[#allocation8 + $0x1e0] sm:$0xff]
    %v281 = vld [vmem:[#allocation8 + $0x1e8] sm:$0xff]
    %v282 = vld [vmem:[#allocation8 + $0x1f0] sm:$0xff]
    %v283 = vld [vmem:[#allocation8 + $0x1f8] sm:$0xff]
    %s284 = scalar_lea.vmem [#allocation5], 256
    %v285 = vld [vmem:[%s284] sm:$0xff]
    %v286 = vld [vmem:[%s284 + $0x8] sm:$0xff]
    %v287 = vld [vmem:[%s284 + $0x10] sm:$0xff]
    %v288 = vld [vmem:[%s284 + $0x18] sm:$0xff]
    %v289 = vld [vmem:[%s284 + $0x20] sm:$0xff]
    %v290 = vld [vmem:[%s284 + $0x28] sm:$0xff]
    %v291 = vld [vmem:[%s284 + $0x30] sm:$0xff]
    %v292 = vld [vmem:[%s284 + $0x38] sm:$0xff]
    %v293 = vld [vmem:[%s284 + $0x40] sm:$0xff]
    %v294 = vld [vmem:[%s284 + $0x48] sm:$0xff]
    %v295 = vld [vmem:[%s284 + $0x50] sm:$0xff]
    %v296 = vld [vmem:[%s284 + $0x58] sm:$0xff]
    %v297 = vld [vmem:[%s284 + $0x60] sm:$0xff]
    %v298 = vld [vmem:[%s284 + $0x68] sm:$0xff]
    %v299 = vld [vmem:[%s284 + $0x70] sm:$0xff]
    %v300 = vld [vmem:[%s284 + $0x78] sm:$0xff]
    %v301 = vld [vmem:[%s284 + $0x80] sm:$0xff]
    %v302 = vld [vmem:[%s284 + $0x88] sm:$0xff]
    %v303 = vld [vmem:[%s284 + $0x90] sm:$0xff]
    %v304 = vld [vmem:[%s284 + $0x98] sm:$0xff]
    %v305 = vld [vmem:[%s284 + $0xa0] sm:$0xff]
    %v306 = vld [vmem:[%s284 + $0xa8] sm:$0xff]
    %v307 = vld [vmem:[%s284 + $0xb0] sm:$0xff]
    %v308 = vld [vmem:[%s284 + $0xb8] sm:$0xff]
    %v309 = vld [vmem:[%s284 + $0xc0] sm:$0xff]
    %v310 = vld [vmem:[%s284 + $0xc8] sm:$0xff]
    %v311 = vld [vmem:[%s284 + $0xd0] sm:$0xff]
    %v312 = vld [vmem:[%s284 + $0xd8] sm:$0xff]
    %v313 = vld [vmem:[%s284 + $0xe0] sm:$0xff]
    %v314 = vld [vmem:[%s284 + $0xe8] sm:$0xff]
    %v315 = vld [vmem:[%s284 + $0xf0] sm:$0xff]
    %v316 = vld [vmem:[%s284 + $0xf8] sm:$0xff]
    %317 = vmatprep.subr.mxu0 %v286
    %318 = vmatpush1.msra.mxu0 %v285
    %319 = vmatprep.subr.mxu0 %v288
    %320 = vmatpush1.msra.mxu0 %v287
    %321 = vmatprep.subr.mxu0 %v290
    %322 = vmatpush1.msra.mxu0 %v289
    %323 = vmatprep.subr.mxu0 %v292
    %324 = vmatpush1.msra.mxu0 %v291
    %325 = vmatprep.subr.mxu0 %v294
    %326 = vmatpush1.msra.mxu0 %v293
    %327 = vmatprep.subr.mxu0 %v296
    %328 = vmatpush1.msra.mxu0 %v295
    %329 = vmatprep.subr.mxu0 %v298
    %330 = vmatpush1.msra.mxu0 %v297
    %331 = vmatprep.subr.mxu0 %v300
    %332 = vmatpush1.msra.mxu0 %v299
    %333 = vmatprep.subr.mxu0 %v302
    %334 = vmatpush1.msra.mxu0 %v301
    %335 = vmatprep.subr.mxu0 %v304
    %336 = vmatpush1.msra.mxu0 %v303
    %337 = vmatprep.subr.mxu0 %v306
    %338 = vmatpush1.msra.mxu0 %v305
    %339 = vmatprep.subr.mxu0 %v308
    %340 = vmatpush1.msra.mxu0 %v307
    %341 = vmatprep.subr.mxu0 %v310
    %342 = vmatpush1.msra.mxu0 %v309
    %343 = vmatprep.subr.mxu0 %v312
    %344 = vmatpush1.msra.mxu0 %v311
    %345 = vmatprep.subr.mxu0 %v314
    %346 = vmatpush1.msra.mxu0 %v313
    %347 = vmatprep.subr.mxu0 %v316
    %348 = vmatpush1.msra.mxu0 %v315
    %349 = vmatprep.subr.mxu0 0.0
    %350 = vmatpush1.msra.mxu0 0.0
    %351 = vmatprep.subr.mxu0 0.0
    %352 = vmatpush1.msra.mxu0 0.0
    %353 = vmatprep.subr.mxu0 0.0
    %354 = vmatpush1.msra.mxu0 0.0
    %355 = vmatprep.subr.mxu0 0.0
    %356 = vmatpush1.msra.mxu0 0.0
    %357 = vmatprep.subr.mxu0 0.0
    %358 = vmatpush1.msra.mxu0 0.0
    %359 = vmatprep.subr.mxu0 0.0
    %360 = vmatpush1.msra.mxu0 0.0
    %361 = vmatprep.subr.mxu0 0.0
    %362 = vmatpush1.msra.mxu0 0.0
    %363 = vmatprep.subr.mxu0 0.0
    %364 = vmatpush1.msra.mxu0 0.0
    %365 = vmatprep.subr.mxu0 0.0
    %366 = vmatpush1.msra.mxu0 0.0
    %367 = vmatprep.subr.mxu0 0.0
    %368 = vmatpush1.msra.mxu0 0.0
    %369 = vmatprep.subr.mxu0 0.0
    %370 = vmatpush1.msra.mxu0 0.0
    %371 = vmatprep.subr.mxu0 0.0
    %372 = vmatpush1.msra.mxu0 0.0
    %373 = vmatprep.subr.mxu0 0.0
    %374 = vmatpush1.msra.mxu0 0.0
    %375 = vmatprep.subr.mxu0 0.0
    %376 = vmatpush1.msra.mxu0 0.0
    %377 = vmatprep.subr.mxu0 0.0
    %378 = vmatpush1.msra.mxu0 0.0
    %379 = vmatprep.subr.mxu0 0.0
    %380 = vmatpush1.msra.mxu0 0.0
    %381 = vmatprep.mubr.f32.mxu0 0.0
    %382 = vmatmul.mubr.f32.gmra.mrb[0].mxu0 %v102
    %v383 = vpop.f32.mrb[0].mxu0
    %v384 = vadd.f32 %v140, %v383
    %v385 = vpop.f32.mrb[0].mxu0
    %v386 = vadd.f32 %v144, %v385
    %387 = vdwg.mxu0
    %v388 = vmax.f32 %v384, 0.0
    %v389 = vmax.f32 %v386, 0.0
    %s390 = scalar_lea.vmem [#allocation8], 512
    %v391 = vld [vmem:[%s390] sm:$0xff]
    %v392 = vld [vmem:[%s390 + $0x8] sm:$0xff]
    %v393 = vld [vmem:[%s390 + $0x10] sm:$0xff]
    %v394 = vld [vmem:[%s390 + $0x18] sm:$0xff]
    %v395 = vld [vmem:[%s390 + $0x20] sm:$0xff]
    %v396 = vld [vmem:[%s390 + $0x28] sm:$0xff]
    %v397 = vld [vmem:[%s390 + $0x30] sm:$0xff]
    %v398 = vld [vmem:[%s390 + $0x38] sm:$0xff]
    %v399 = vld [vmem:[%s390 + $0x40] sm:$0xff]
    %v400 = vld [vmem:[%s390 + $0x48] sm:$0xff]
    %v401 = vld [vmem:[%s390 + $0x50] sm:$0xff]
    %v402 = vld [vmem:[%s390 + $0x58] sm:$0xff]
    %v403 = vld [vmem:[%s390 + $0x60] sm:$0xff]
    %v404 = vld [vmem:[%s390 + $0x68] sm:$0xff]
    %v405 = vld [vmem:[%s390 + $0x70] sm:$0xff]
    %v406 = vld [vmem:[%s390 + $0x78] sm:$0xff]
    %v407 = vld [vmem:[%s390 + $0x80] sm:$0xff]
    %v408 = vld [vmem:[%s390 + $0x88] sm:$0xff]
    %v409 = vld [vmem:[%s390 + $0x90] sm:$0xff]
    %v410 = vld [vmem:[%s390 + $0x98] sm:$0xff]
    %v411 = vld [vmem:[%s390 + $0xa0] sm:$0xff]
    %v412 = vld [vmem:[%s390 + $0xa8] sm:$0xff]
    %v413 = vld [vmem:[%s390 + $0xb0] sm:$0xff]
    %v414 = vld [vmem:[%s390 + $0xb8] sm:$0xff]
    %v415 = vld [vmem:[%s390 + $0xc0] sm:$0xff]
    %v416 = vld [vmem:[%s390 + $0xc8] sm:$0xff]
    %v417 = vld [vmem:[%s390 + $0xd0] sm:$0xff]
    %v418 = vld [vmem:[%s390 + $0xd8] sm:$0xff]
    %v419 = vld [vmem:[%s390 + $0xe0] sm:$0xff]
    %v420 = vld [vmem:[%s390 + $0xe8] sm:$0xff]
    %v421 = vld [vmem:[%s390 + $0xf0] sm:$0xff]
    %v422 = vld [vmem:[%s390 + $0xf8] sm:$0xff]
    %v423 = vld [vmem:[%s390 + $0x100] sm:$0xff]
    %v424 = vld [vmem:[%s390 + $0x108] sm:$0xff]
    %v425 = vld [vmem:[%s390 + $0x110] sm:$0xff]
    %v426 = vld [vmem:[%s390 + $0x118] sm:$0xff]
    %v427 = vld [vmem:[%s390 + $0x120] sm:$0xff]
    %v428 = vld [vmem:[%s390 + $0x128] sm:$0xff]
    %v429 = vld [vmem:[%s390 + $0x130] sm:$0xff]
    %v430 = vld [vmem:[%s390 + $0x138] sm:$0xff]
    %v431 = vld [vmem:[%s390 + $0x140] sm:$0xff]
    %v432 = vld [vmem:[%s390 + $0x148] sm:$0xff]
    %v433 = vld [vmem:[%s390 + $0x150] sm:$0xff]
    %v434 = vld [vmem:[%s390 + $0x158] sm:$0xff]
    %v435 = vld [vmem:[%s390 + $0x160] sm:$0xff]
    %v436 = vld [vmem:[%s390 + $0x168] sm:$0xff]
    %v437 = vld [vmem:[%s390 + $0x170] sm:$0xff]
    %v438 = vld [vmem:[%s390 + $0x178] sm:$0xff]
    %v439 = vld [vmem:[%s390 + $0x180] sm:$0xff]
    %v440 = vld [vmem:[%s390 + $0x188] sm:$0xff]
    %v441 = vld [vmem:[%s390 + $0x190] sm:$0xff]
    %v442 = vld [vmem:[%s390 + $0x198] sm:$0xff]
    %v443 = vld [vmem:[%s390 + $0x1a0] sm:$0xff]
    %v444 = vld [vmem:[%s390 + $0x1a8] sm:$0xff]
    %v445 = vld [vmem:[%s390 + $0x1b0] sm:$0xff]
    %v446 = vld [vmem:[%s390 + $0x1b8] sm:$0xff]
    %v447 = vld [vmem:[%s390 + $0x1c0] sm:$0xff]
    %v448 = vld [vmem:[%s390 + $0x1c8] sm:$0xff]
    %v449 = vld [vmem:[%s390 + $0x1d0] sm:$0xff]
    %v450 = vld [vmem:[%s390 + $0x1d8] sm:$0xff]
    %v451 = vld [vmem:[%s390 + $0x1e0] sm:$0xff]
    %v452 = vld [vmem:[%s390 + $0x1e8] sm:$0xff]
    %v453 = vld [vmem:[%s390 + $0x1f0] sm:$0xff]
    %v454 = vld [vmem:[%s390 + $0x1f8] sm:$0xff]
    %455 = vmatprep.subr.mxu0 %v392
    %456 = vmatpush1.msra.mxu0 %v391
    %457 = vmatprep.subr.mxu0 %v394
    %458 = vmatpush1.msra.mxu0 %v393
    %459 = vmatprep.subr.mxu0 %v396
    %460 = vmatpush1.msra.mxu0 %v395
    %461 = vmatprep.subr.mxu0 %v398
    %462 = vmatpush1.msra.mxu0 %v397
    %463 = vmatprep.subr.mxu0 %v400
    %464 = vmatpush1.msra.mxu0 %v399
    %465 = vmatprep.subr.mxu0 %v402
    %466 = vmatpush1.msra.mxu0 %v401
    %467 = vmatprep.subr.mxu0 %v404
    %468 = vmatpush1.msra.mxu0 %v403
    %469 = vmatprep.subr.mxu0 %v406
    %470 = vmatpush1.msra.mxu0 %v405
    %471 = vmatprep.subr.mxu0 %v408
    %472 = vmatpush1.msra.mxu0 %v407
    %473 = vmatprep.subr.mxu0 %v410
    %474 = vmatpush1.msra.mxu0 %v409
    %475 = vmatprep.subr.mxu0 %v412
    %476 = vmatpush1.msra.mxu0 %v411
    %477 = vmatprep.subr.mxu0 %v414
    %478 = vmatpush1.msra.mxu0 %v413
    %479 = vmatprep.subr.mxu0 %v416
    %480 = vmatpush1.msra.mxu0 %v415
    %481 = vmatprep.subr.mxu0 %v418
    %482 = vmatpush1.msra.mxu0 %v417
    %483 = vmatprep.subr.mxu0 %v420
    %484 = vmatpush1.msra.mxu0 %v419
    %485 = vmatprep.subr.mxu0 %v422
    %486 = vmatpush1.msra.mxu0 %v421
    %487 = vmatprep.subr.mxu0 %v424
    %488 = vmatpush1.msra.mxu0 %v423
    %489 = vmatprep.subr.mxu0 %v426
    %490 = vmatpush1.msra.mxu0 %v425
    %491 = vmatprep.subr.mxu0 %v428
    %492 = vmatpush1.msra.mxu0 %v427
    %493 = vmatprep.subr.mxu0 %v430
    %494 = vmatpush1.msra.mxu0 %v429
    %495 = vmatprep.subr.mxu0 %v432
    %496 = vmatpush1.msra.mxu0 %v431
    %497 = vmatprep.subr.mxu0 %v434
    %498 = vmatpush1.msra.mxu0 %v433
    %499 = vmatprep.subr.mxu0 %v436
    %500 = vmatpush1.msra.mxu0 %v435
    %501 = vmatprep.subr.mxu0 %v438
    %502 = vmatpush1.msra.mxu0 %v437
    %503 = vmatprep.subr.mxu0 %v440
    %504 = vmatpush1.msra.mxu0 %v439
    %505 = vmatprep.subr.mxu0 %v442
    %506 = vmatpush1.msra.mxu0 %v441
    %507 = vmatprep.subr.mxu0 %v444
    %508 = vmatpush1.msra.mxu0 %v443
    %509 = vmatprep.subr.mxu0 %v446
    %510 = vmatpush1.msra.mxu0 %v445
    %511 = vmatprep.subr.mxu0 %v448
    %512 = vmatpush1.msra.mxu0 %v447
    %513 = vmatprep.subr.mxu0 %v450
    %514 = vmatpush1.msra.mxu0 %v449
    %515 = vmatprep.subr.mxu0 %v452
    %516 = vmatpush1.msra.mxu0 %v451
    %517 = vmatprep.subr.mxu0 %v454
    %518 = vmatpush1.msra.mxu0 %v453
    %519 = vmatprep.mubr.f32.mxu0 %v389
    %520 = vmatmul.mubr.f32.gmra.mrb[0].mxu0 %v388
    %v521 = vpop.f32.mrb[0].mxu0
    %v522 = vadd.f32 0.0, %v521
    %v523 = vpop.f32.mrb[0].mxu0
    %v524 = vadd.f32 0.0, %v523
    %525 = vdwg.mxu0
    %526 = vmatprep.subr.mxu0 %v221
    %527 = vmatpush1.msra.mxu0 %v220
    %528 = vmatprep.subr.mxu0 %v223
    %529 = vmatpush1.msra.mxu0 %v222
    %530 = vmatprep.subr.mxu0 %v225
    %531 = vmatpush1.msra.mxu0 %v224
    %532 = vmatprep.subr.mxu0 %v227
    %533 = vmatpush1.msra.mxu0 %v226
    %534 = vmatprep.subr.mxu0 %v229
    %535 = vmatpush1.msra.mxu0 %v228
    %536 = vmatprep.subr.mxu0 %v231
    %537 = vmatpush1.msra.mxu0 %v230
    %538 = vmatprep.subr.mxu0 %v233
    %539 = vmatpush1.msra.mxu0 %v232
    %540 = vmatprep.subr.mxu0 %v235
    %541 = vmatpush1.msra.mxu0 %v234
    %542 = vmatprep.subr.mxu0 %v237
    %543 = vmatpush1.msra.mxu0 %v236
    %544 = vmatprep.subr.mxu0 %v239
    %545 = vmatpush1.msra.mxu0 %v238
    %546 = vmatprep.subr.mxu0 %v241
    %547 = vmatpush1.msra.mxu0 %v240
    %548 = vmatprep.subr.mxu0 %v243
    %549 = vmatpush1.msra.mxu0 %v242
    %550 = vmatprep.subr.mxu0 %v245
    %551 = vmatpush1.msra.mxu0 %v244
    %552 = vmatprep.subr.mxu0 %v247
    %553 = vmatpush1.msra.mxu0 %v246
    %554 = vmatprep.subr.mxu0 %v249
    %555 = vmatpush1.msra.mxu0 %v248
    %556 = vmatprep.subr.mxu0 %v251
    %557 = vmatpush1.msra.mxu0 %v250
    %558 = vmatprep.subr.mxu0 %v253
    %559 = vmatpush1.msra.mxu0 %v252
    %560 = vmatprep.subr.mxu0 %v255
    %561 = vmatpush1.msra.mxu0 %v254
    %562 = vmatprep.subr.mxu0 %v257
    %563 = vmatpush1.msra.mxu0 %v256
    %564 = vmatprep.subr.mxu0 %v259
    %565 = vmatpush1.msra.mxu0 %v258
    %566 = vmatprep.subr.mxu0 %v261
    %567 = vmatpush1.msra.mxu0 %v260
    %568 = vmatprep.subr.mxu0 %v263
    %569 = vmatpush1.msra.mxu0 %v262
    %570 = vmatprep.subr.mxu0 %v265
    %571 = vmatpush1.msra.mxu0 %v264
    %572 = vmatprep.subr.mxu0 %v267
    %573 = vmatpush1.msra.mxu0 %v266
    %574 = vmatprep.subr.mxu0 %v269
    %575 = vmatpush1.msra.mxu0 %v268
    %576 = vmatprep.subr.mxu0 %v271
    %577 = vmatpush1.msra.mxu0 %v270
    %578 = vmatprep.subr.mxu0 %v273
    %579 = vmatpush1.msra.mxu0 %v272
    %580 = vmatprep.subr.mxu0 %v275
    %581 = vmatpush1.msra.mxu0 %v274
    %582 = vmatprep.subr.mxu0 %v277
    %583 = vmatpush1.msra.mxu0 %v276
    %584 = vmatprep.subr.mxu0 %v279
    %585 = vmatpush1.msra.mxu0 %v278
    %586 = vmatprep.subr.mxu0 %v281
    %587 = vmatpush1.msra.mxu0 %v280
    %588 = vmatprep.subr.mxu0 %v283
    %589 = vmatpush1.msra.mxu0 %v282
    %590 = vmatprep.mubr.f32.mxu0 %v219
    %591 = vmatmul.mubr.f32.gmra.mrb[0].mxu0 %v218
    %v592 = vpop.f32.mrb[0].mxu0
    %v593 = vadd.f32 %v522, %v592
    %v594 = vpop.f32.mrb[0].mxu0
    %v595 = vadd.f32 %v524, %v594
    %596 = vdwg.mxu0
    %s597 = scalar_lea.vmem [#allocation5], 512
    %v598 = vld [vmem:[%s597] sm:$0xff]
    %v599 = vld [vmem:[%s597 + $0x8] sm:$0xff]
    %v600 = vld [vmem:[%s597 + $0x10] sm:$0xff]
    %v601 = vld [vmem:[%s597 + $0x18] sm:$0xff]
    %v602 = vld [vmem:[%s597 + $0x20] sm:$0xff]
    %v603 = vld [vmem:[%s597 + $0x28] sm:$0xff]
    %v604 = vld [vmem:[%s597 + $0x30] sm:$0xff]
    %v605 = vld [vmem:[%s597 + $0x38] sm:$0xff]
    %v606 = vld [vmem:[%s597 + $0x40] sm:$0xff]
    %v607 = vld [vmem:[%s597 + $0x48] sm:$0xff]
    %v608 = vld [vmem:[%s597 + $0x50] sm:$0xff]
    %v609 = vld [vmem:[%s597 + $0x58] sm:$0xff]
    %v610 = vld [vmem:[%s597 + $0x60] sm:$0xff]
    %v611 = vld [vmem:[%s597 + $0x68] sm:$0xff]
    %v612 = vld [vmem:[%s597 + $0x70] sm:$0xff]
    %v613 = vld [vmem:[%s597 + $0x78] sm:$0xff]
    %v614 = vld [vmem:[%s597 + $0x80] sm:$0xff]
    %v615 = vld [vmem:[%s597 + $0x88] sm:$0xff]
    %v616 = vld [vmem:[%s597 + $0x90] sm:$0xff]
    %v617 = vld [vmem:[%s597 + $0x98] sm:$0xff]
    %v618 = vld [vmem:[%s597 + $0xa0] sm:$0xff]
    %v619 = vld [vmem:[%s597 + $0xa8] sm:$0xff]
    %v620 = vld [vmem:[%s597 + $0xb0] sm:$0xff]
    %v621 = vld [vmem:[%s597 + $0xb8] sm:$0xff]
    %v622 = vld [vmem:[%s597 + $0xc0] sm:$0xff]
    %v623 = vld [vmem:[%s597 + $0xc8] sm:$0xff]
    %v624 = vld [vmem:[%s597 + $0xd0] sm:$0xff]
    %v625 = vld [vmem:[%s597 + $0xd8] sm:$0xff]
    %v626 = vld [vmem:[%s597 + $0xe0] sm:$0xff]
    %v627 = vld [vmem:[%s597 + $0xe8] sm:$0xff]
    %v628 = vld [vmem:[%s597 + $0xf0] sm:$0xff]
    %v629 = vld [vmem:[%s597 + $0xf8] sm:$0xff]
    %630 = vmatprep.subr.mxu0 %v599
    %631 = vmatpush1.msra.mxu0 %v598
    %632 = vmatprep.subr.mxu0 %v601
    %633 = vmatpush1.msra.mxu0 %v600
    %634 = vmatprep.subr.mxu0 %v603
    %635 = vmatpush1.msra.mxu0 %v602
    %636 = vmatprep.subr.mxu0 %v605
    %637 = vmatpush1.msra.mxu0 %v604
    %638 = vmatprep.subr.mxu0 %v607
    %639 = vmatpush1.msra.mxu0 %v606
    %640 = vmatprep.subr.mxu0 %v609
    %641 = vmatpush1.msra.mxu0 %v608
    %642 = vmatprep.subr.mxu0 %v611
    %643 = vmatpush1.msra.mxu0 %v610
    %644 = vmatprep.subr.mxu0 %v613
    %645 = vmatpush1.msra.mxu0 %v612
    %646 = vmatprep.subr.mxu0 %v615
    %647 = vmatpush1.msra.mxu0 %v614
    %648 = vmatprep.subr.mxu0 %v617
    %649 = vmatpush1.msra.mxu0 %v616
    %650 = vmatprep.subr.mxu0 %v619
    %651 = vmatpush1.msra.mxu0 %v618
    %652 = vmatprep.subr.mxu0 %v621
    %653 = vmatpush1.msra.mxu0 %v620
    %654 = vmatprep.subr.mxu0 %v623
    %655 = vmatpush1.msra.mxu0 %v622
    %656 = vmatprep.subr.mxu0 %v625
    %657 = vmatpush1.msra.mxu0 %v624
    %658 = vmatprep.subr.mxu0 %v627
    %659 = vmatpush1.msra.mxu0 %v626
    %660 = vmatprep.subr.mxu0 %v629
    %661 = vmatpush1.msra.mxu0 %v628
    %662 = vmatprep.subr.mxu0 0.0
    %663 = vmatpush1.msra.mxu0 0.0
    %664 = vmatprep.subr.mxu0 0.0
    %665 = vmatpush1.msra.mxu0 0.0
    %666 = vmatprep.subr.mxu0 0.0
    %667 = vmatpush1.msra.mxu0 0.0
    %668 = vmatprep.subr.mxu0 0.0
    %669 = vmatpush1.msra.mxu0 0.0
    %670 = vmatprep.subr.mxu0 0.0
    %671 = vmatpush1.msra.mxu0 0.0
    %672 = vmatprep.subr.mxu0 0.0
    %673 = vmatpush1.msra.mxu0 0.0
    %674 = vmatprep.subr.mxu0 0.0
    %675 = vmatpush1.msra.mxu0 0.0
    %676 = vmatprep.subr.mxu0 0.0
    %677 = vmatpush1.msra.mxu0 0.0
    %678 = vmatprep.subr.mxu0 0.0
    %679 = vmatpush1.msra.mxu0 0.0
    %680 = vmatprep.subr.mxu0 0.0
    %681 = vmatpush1.msra.mxu0 0.0
    %682 = vmatprep.subr.mxu0 0.0
    %683 = vmatpush1.msra.mxu0 0.0
    %684 = vmatprep.subr.mxu0 0.0
    %685 = vmatpush1.msra.mxu0 0.0
    %686 = vmatprep.subr.mxu0 0.0
    %687 = vmatpush1.msra.mxu0 0.0
    %688 = vmatprep.subr.mxu0 0.0
    %689 = vmatpush1.msra.mxu0 0.0
    %690 = vmatprep.subr.mxu0 0.0
    %691 = vmatpush1.msra.mxu0 0.0
    %692 = vmatprep.subr.mxu0 0.0
    %693 = vmatpush1.msra.mxu0 0.0
    %694 = vmatprep.mubr.f32.mxu0 0.0
    %695 = vmatmul.mubr.f32.gmra.mrb[0].mxu0 %v102
    %v696 = vpop.f32.mrb[0].mxu0
    %v697 = vadd.f32 %v140, %v696
    %v698 = vpop.f32.mrb[0].mxu0
    %v699 = vadd.f32 %v144, %v698
    %700 = vdwg.mxu0
    %v701 = vmax.f32 %v697, 0.0
    %v702 = vmax.f32 %v699, 0.0
    %s703 = scalar_lea.vmem [#allocation8], 1024
    %v704 = vld [vmem:[%s703] sm:$0xff]
    %v705 = vld [vmem:[%s703 + $0x8] sm:$0xff]
    %v706 = vld [vmem:[%s703 + $0x10] sm:$0xff]
    %v707 = vld [vmem:[%s703 + $0x18] sm:$0xff]
    %v708 = vld [vmem:[%s703 + $0x20] sm:$0xff]
    %v709 = vld [vmem:[%s703 + $0x28] sm:$0xff]
    %v710 = vld [vmem:[%s703 + $0x30] sm:$0xff]
    %v711 = vld [vmem:[%s703 + $0x38] sm:$0xff]
    %v712 = vld [vmem:[%s703 + $0x40] sm:$0xff]
    %v713 = vld [vmem:[%s703 + $0x48] sm:$0xff]
    %v714 = vld [vmem:[%s703 + $0x50] sm:$0xff]
    %v715 = vld [vmem:[%s703 + $0x58] sm:$0xff]
    %v716 = vld [vmem:[%s703 + $0x60] sm:$0xff]
    %v717 = vld [vmem:[%s703 + $0x68] sm:$0xff]
    %v718 = vld [vmem:[%s703 + $0x70] sm:$0xff]
    %v719 = vld [vmem:[%s703 + $0x78] sm:$0xff]
    %v720 = vld [vmem:[%s703 + $0x80] sm:$0xff]
    %v721 = vld [vmem:[%s703 + $0x88] sm:$0xff]
    %v722 = vld [vmem:[%s703 + $0x90] sm:$0xff]
    %v723 = vld [vmem:[%s703 + $0x98] sm:$0xff]
    %v724 = vld [vmem:[%s703 + $0xa0] sm:$0xff]
    %v725 = vld [vmem:[%s703 + $0xa8] sm:$0xff]
    %v726 = vld [vmem:[%s703 + $0xb0] sm:$0xff]
    %v727 = vld [vmem:[%s703 + $0xb8] sm:$0xff]
    %v728 = vld [vmem:[%s703 + $0xc0] sm:$0xff]
    %v729 = vld [vmem:[%s703 + $0xc8] sm:$0xff]
    %v730 = vld [vmem:[%s703 + $0xd0] sm:$0xff]
    %v731 = vld [vmem:[%s703 + $0xd8] sm:$0xff]
    %v732 = vld [vmem:[%s703 + $0xe0] sm:$0xff]
    %v733 = vld [vmem:[%s703 + $0xe8] sm:$0xff]
    %v734 = vld [vmem:[%s703 + $0xf0] sm:$0xff]
    %v735 = vld [vmem:[%s703 + $0xf8] sm:$0xff]
    %v736 = vld [vmem:[%s703 + $0x100] sm:$0xff]
    %v737 = vld [vmem:[%s703 + $0x108] sm:$0xff]
    %v738 = vld [vmem:[%s703 + $0x110] sm:$0xff]
    %v739 = vld [vmem:[%s703 + $0x118] sm:$0xff]
    %v740 = vld [vmem:[%s703 + $0x120] sm:$0xff]
    %v741 = vld [vmem:[%s703 + $0x128] sm:$0xff]
    %v742 = vld [vmem:[%s703 + $0x130] sm:$0xff]
    %v743 = vld [vmem:[%s703 + $0x138] sm:$0xff]
    %v744 = vld [vmem:[%s703 + $0x140] sm:$0xff]
    %v745 = vld [vmem:[%s703 + $0x148] sm:$0xff]
    %v746 = vld [vmem:[%s703 + $0x150] sm:$0xff]
    %v747 = vld [vmem:[%s703 + $0x158] sm:$0xff]
    %v748 = vld [vmem:[%s703 + $0x160] sm:$0xff]
    %v749 = vld [vmem:[%s703 + $0x168] sm:$0xff]
    %v750 = vld [vmem:[%s703 + $0x170] sm:$0xff]
    %v751 = vld [vmem:[%s703 + $0x178] sm:$0xff]
    %v752 = vld [vmem:[%s703 + $0x180] sm:$0xff]
    %v753 = vld [vmem:[%s703 + $0x188] sm:$0xff]
    %v754 = vld [vmem:[%s703 + $0x190] sm:$0xff]
    %v755 = vld [vmem:[%s703 + $0x198] sm:$0xff]
    %v756 = vld [vmem:[%s703 + $0x1a0] sm:$0xff]
    %v757 = vld [vmem:[%s703 + $0x1a8] sm:$0xff]
    %v758 = vld [vmem:[%s703 + $0x1b0] sm:$0xff]
    %v759 = vld [vmem:[%s703 + $0x1b8] sm:$0xff]
    %v760 = vld [vmem:[%s703 + $0x1c0] sm:$0xff]
    %v761 = vld [vmem:[%s703 + $0x1c8] sm:$0xff]
    %v762 = vld [vmem:[%s703 + $0x1d0] sm:$0xff]
    %v763 = vld [vmem:[%s703 + $0x1d8] sm:$0xff]
    %v764 = vld [vmem:[%s703 + $0x1e0] sm:$0xff]
    %v765 = vld [vmem:[%s703 + $0x1e8] sm:$0xff]
    %v766 = vld [vmem:[%s703 + $0x1f0] sm:$0xff]
    %v767 = vld [vmem:[%s703 + $0x1f8] sm:$0xff]
    %768 = vmatprep.subr.mxu0 %v705
    %769 = vmatpush1.msra.mxu0 %v704
    %770 = vmatprep.subr.mxu0 %v707
    %771 = vmatpush1.msra.mxu0 %v706
    %772 = vmatprep.subr.mxu0 %v709
    %773 = vmatpush1.msra.mxu0 %v708
    %774 = vmatprep.subr.mxu0 %v711
    %775 = vmatpush1.msra.mxu0 %v710
    %776 = vmatprep.subr.mxu0 %v713
    %777 = vmatpush1.msra.mxu0 %v712
    %778 = vmatprep.subr.mxu0 %v715
    %779 = vmatpush1.msra.mxu0 %v714
    %780 = vmatprep.subr.mxu0 %v717
    %781 = vmatpush1.msra.mxu0 %v716
    %782 = vmatprep.subr.mxu0 %v719
    %783 = vmatpush1.msra.mxu0 %v718
    %784 = vmatprep.subr.mxu0 %v721
    %785 = vmatpush1.msra.mxu0 %v720
    %786 = vmatprep.subr.mxu0 %v723
    %787 = vmatpush1.msra.mxu0 %v722
    %788 = vmatprep.subr.mxu0 %v725
    %789 = vmatpush1.msra.mxu0 %v724
    %790 = vmatprep.subr.mxu0 %v727
    %791 = vmatpush1.msra.mxu0 %v726
    %792 = vmatprep.subr.mxu0 %v729
    %793 = vmatpush1.msra.mxu0 %v728
    %794 = vmatprep.subr.mxu0 %v731
    %795 = vmatpush1.msra.mxu0 %v730
    %796 = vmatprep.subr.mxu0 %v733
    %797 = vmatpush1.msra.mxu0 %v732
    %798 = vmatprep.subr.mxu0 %v735
    %799 = vmatpush1.msra.mxu0 %v734
    %800 = vmatprep.subr.mxu0 %v737
    %801 = vmatpush1.msra.mxu0 %v736
    %802 = vmatprep.subr.mxu0 %v739
    %803 = vmatpush1.msra.mxu0 %v738
    %804 = vmatprep.subr.mxu0 %v741
    %805 = vmatpush1.msra.mxu0 %v740
    %806 = vmatprep.subr.mxu0 %v743
    %807 = vmatpush1.msra.mxu0 %v742
    %808 = vmatprep.subr.mxu0 %v745
    %809 = vmatpush1.msra.mxu0 %v744
    %810 = vmatprep.subr.mxu0 %v747
    %811 = vmatpush1.msra.mxu0 %v746
    %812 = vmatprep.subr.mxu0 %v749
    %813 = vmatpush1.msra.mxu0 %v748
    %814 = vmatprep.subr.mxu0 %v751
    %815 = vmatpush1.msra.mxu0 %v750
    %816 = vmatprep.subr.mxu0 %v753
    %817 = vmatpush1.msra.mxu0 %v752
    %818 = vmatprep.subr.mxu0 %v755
    %819 = vmatpush1.msra.mxu0 %v754
    %820 = vmatprep.subr.mxu0 %v757
    %821 = vmatpush1.msra.mxu0 %v756
    %822 = vmatprep.subr.mxu0 %v759
    %823 = vmatpush1.msra.mxu0 %v758
    %824 = vmatprep.subr.mxu0 %v761
    %825 = vmatpush1.msra.mxu0 %v760
    %826 = vmatprep.subr.mxu0 %v763
    %827 = vmatpush1.msra.mxu0 %v762
    %828 = vmatprep.subr.mxu0 %v765
    %829 = vmatpush1.msra.mxu0 %v764
    %830 = vmatprep.subr.mxu0 %v767
    %831 = vmatpush1.msra.mxu0 %v766
    %832 = vmatprep.mubr.f32.mxu0 %v702
    %833 = vmatmul.mubr.f32.gmra.mrb[0].mxu0 %v701
    %v834 = vpop.f32.mrb[0].mxu0
    %v835 = vadd.f32 0.0, %v834
    %v836 = vpop.f32.mrb[0].mxu0
    %v837 = vadd.f32 0.0, %v836
    %838 = vdwg.mxu0
    %v839 = vadd.f32 %v593, %v835
    %v840 = vadd.f32 %v595, %v837
    %s841 = scalar_lea.vmem [#allocation5], 768
    %v842 = vld [vmem:[%s841] sm:$0xff]
    %v843 = vld [vmem:[%s841 + $0x8] sm:$0xff]
    %v844 = vld [vmem:[%s841 + $0x10] sm:$0xff]
    %v845 = vld [vmem:[%s841 + $0x18] sm:$0xff]
    %v846 = vld [vmem:[%s841 + $0x20] sm:$0xff]
    %v847 = vld [vmem:[%s841 + $0x28] sm:$0xff]
    %v848 = vld [vmem:[%s841 + $0x30] sm:$0xff]
    %v849 = vld [vmem:[%s841 + $0x38] sm:$0xff]
    %v850 = vld [vmem:[%s841 + $0x40] sm:$0xff]
    %v851 = vld [vmem:[%s841 + $0x48] sm:$0xff]
    %v852 = vld [vmem:[%s841 + $0x50] sm:$0xff]
    %v853 = vld [vmem:[%s841 + $0x58] sm:$0xff]
    %v854 = vld [vmem:[%s841 + $0x60] sm:$0xff]
    %v855 = vld [vmem:[%s841 + $0x68] sm:$0xff]
    %v856 = vld [vmem:[%s841 + $0x70] sm:$0xff]
    %v857 = vld [vmem:[%s841 + $0x78] sm:$0xff]
    %v858 = vld [vmem:[%s841 + $0x80] sm:$0xff]
    %v859 = vld [vmem:[%s841 + $0x88] sm:$0xff]
    %v860 = vld [vmem:[%s841 + $0x90] sm:$0xff]
    %v861 = vld [vmem:[%s841 + $0x98] sm:$0xff]
    %v862 = vld [vmem:[%s841 + $0xa0] sm:$0xff]
    %v863 = vld [vmem:[%s841 + $0xa8] sm:$0xff]
    %v864 = vld [vmem:[%s841 + $0xb0] sm:$0xff]
    %v865 = vld [vmem:[%s841 + $0xb8] sm:$0xff]
    %v866 = vld [vmem:[%s841 + $0xc0] sm:$0xff]
    %v867 = vld [vmem:[%s841 + $0xc8] sm:$0xff]
    %v868 = vld [vmem:[%s841 + $0xd0] sm:$0xff]
    %v869 = vld [vmem:[%s841 + $0xd8] sm:$0xff]
    %v870 = vld [vmem:[%s841 + $0xe0] sm:$0xff]
    %v871 = vld [vmem:[%s841 + $0xe8] sm:$0xff]
    %v872 = vld [vmem:[%s841 + $0xf0] sm:$0xff]
    %v873 = vld [vmem:[%s841 + $0xf8] sm:$0xff]
    %874 = vmatprep.subr.mxu0 %v843
    %875 = vmatpush1.msra.mxu0 %v842
    %876 = vmatprep.subr.mxu0 %v845
    %877 = vmatpush1.msra.mxu0 %v844
    %878 = vmatprep.subr.mxu0 %v847
    %879 = vmatpush1.msra.mxu0 %v846
    %880 = vmatprep.subr.mxu0 %v849
    %881 = vmatpush1.msra.mxu0 %v848
    %882 = vmatprep.subr.mxu0 %v851
    %883 = vmatpush1.msra.mxu0 %v850
    %884 = vmatprep.subr.mxu0 %v853
    %885 = vmatpush1.msra.mxu0 %v852
    %886 = vmatprep.subr.mxu0 %v855
    %887 = vmatpush1.msra.mxu0 %v854
    %888 = vmatprep.subr.mxu0 %v857
    %889 = vmatpush1.msra.mxu0 %v856
    %890 = vmatprep.subr.mxu0 %v859
    %891 = vmatpush1.msra.mxu0 %v858
    %892 = vmatprep.subr.mxu0 %v861
    %893 = vmatpush1.msra.mxu0 %v860
    %894 = vmatprep.subr.mxu0 %v863
    %895 = vmatpush1.msra.mxu0 %v862
    %896 = vmatprep.subr.mxu0 %v865
    %897 = vmatpush1.msra.mxu0 %v864
    %898 = vmatprep.subr.mxu0 %v867
    %899 = vmatpush1.msra.mxu0 %v866
    %900 = vmatprep.subr.mxu0 %v869
    %901 = vmatpush1.msra.mxu0 %v868
    %902 = vmatprep.subr.mxu0 %v871
    %903 = vmatpush1.msra.mxu0 %v870
    %904 = vmatprep.subr.mxu0 %v873
    %905 = vmatpush1.msra.mxu0 %v872
    %906 = vmatprep.subr.mxu0 0.0
    %907 = vmatpush1.msra.mxu0 0.0
    %908 = vmatprep.subr.mxu0 0.0
    %909 = vmatpush1.msra.mxu0 0.0
    %910 = vmatprep.subr.mxu0 0.0
    %911 = vmatpush1.msra.mxu0 0.0
    %912 = vmatprep.subr.mxu0 0.0
    %913 = vmatpush1.msra.mxu0 0.0
    %914 = vmatprep.subr.mxu0 0.0
    %915 = vmatpush1.msra.mxu0 0.0
    %916 = vmatprep.subr.mxu0 0.0
    %917 = vmatpush1.msra.mxu0 0.0
    %918 = vmatprep.subr.mxu0 0.0
    %919 = vmatpush1.msra.mxu0 0.0
    %920 = vmatprep.subr.mxu0 0.0
    %921 = vmatpush1.msra.mxu0 0.0
    %922 = vmatprep.subr.mxu0 0.0
    %923 = vmatpush1.msra.mxu0 0.0
    %924 = vmatprep.subr.mxu0 0.0
    %925 = vmatpush1.msra.mxu0 0.0
    %926 = vmatprep.subr.mxu0 0.0
    %927 = vmatpush1.msra.mxu0 0.0
    %928 = vmatprep.subr.mxu0 0.0
    %929 = vmatpush1.msra.mxu0 0.0
    %930 = vmatprep.subr.mxu0 0.0
    %931 = vmatpush1.msra.mxu0 0.0
    %932 = vmatprep.subr.mxu0 0.0
    %933 = vmatpush1.msra.mxu0 0.0
    %934 = vmatprep.subr.mxu0 0.0
    %935 = vmatpush1.msra.mxu0 0.0
    %936 = vmatprep.subr.mxu0 0.0
    %937 = vmatpush1.msra.mxu0 0.0
    %938 = vmatprep.mubr.f32.mxu0 0.0
    %939 = vmatmul.mubr.f32.gmra.mrb[0].mxu0 %v102
    %v940 = vpop.f32.mrb[0].mxu0
    %v941 = vadd.f32 %v140, %v940
    %v942 = vpop.f32.mrb[0].mxu0
    %v943 = vadd.f32 %v144, %v942
    %944 = vdwg.mxu0
    %v945 = vmax.f32 %v941, 0.0
    %v946 = vmax.f32 %v943, 0.0
    %s947 = scalar_lea.vmem [#allocation8], 1536
    %v948 = vld [vmem:[%s947] sm:$0xff]
    %v949 = vld [vmem:[%s947 + $0x8] sm:$0xff]
    %v950 = vld [vmem:[%s947 + $0x10] sm:$0xff]
    %v951 = vld [vmem:[%s947 + $0x18] sm:$0xff]
    %v952 = vld [vmem:[%s947 + $0x20] sm:$0xff]
    %v953 = vld [vmem:[%s947 + $0x28] sm:$0xff]
    %v954 = vld [vmem:[%s947 + $0x30] sm:$0xff]
    %v955 = vld [vmem:[%s947 + $0x38] sm:$0xff]
    %v956 = vld [vmem:[%s947 + $0x40] sm:$0xff]
    %v957 = vld [vmem:[%s947 + $0x48] sm:$0xff]
    %v958 = vld [vmem:[%s947 + $0x50] sm:$0xff]
    %v959 = vld [vmem:[%s947 + $0x58] sm:$0xff]
    %v960 = vld [vmem:[%s947 + $0x60] sm:$0xff]
    %v961 = vld [vmem:[%s947 + $0x68] sm:$0xff]
    %v962 = vld [vmem:[%s947 + $0x70] sm:$0xff]
    %v963 = vld [vmem:[%s947 + $0x78] sm:$0xff]
    %v964 = vld [vmem:[%s947 + $0x80] sm:$0xff]
    %v965 = vld [vmem:[%s947 + $0x88] sm:$0xff]
    %v966 = vld [vmem:[%s947 + $0x90] sm:$0xff]
    %v967 = vld [vmem:[%s947 + $0x98] sm:$0xff]
    %v968 = vld [vmem:[%s947 + $0xa0] sm:$0xff]
    %v969 = vld [vmem:[%s947 + $0xa8] sm:$0xff]
    %v970 = vld [vmem:[%s947 + $0xb0] sm:$0xff]
    %v971 = vld [vmem:[%s947 + $0xb8] sm:$0xff]
    %v972 = vld [vmem:[%s947 + $0xc0] sm:$0xff]
    %v973 = vld [vmem:[%s947 + $0xc8] sm:$0xff]
    %v974 = vld [vmem:[%s947 + $0xd0] sm:$0xff]
    %v975 = vld [vmem:[%s947 + $0xd8] sm:$0xff]
    %v976 = vld [vmem:[%s947 + $0xe0] sm:$0xff]
    %v977 = vld [vmem:[%s947 + $0xe8] sm:$0xff]
    %v978 = vld [vmem:[%s947 + $0xf0] sm:$0xff]
    %v979 = vld [vmem:[%s947 + $0xf8] sm:$0xff]
    %v980 = vld [vmem:[%s947 + $0x100] sm:$0xff]
    %v981 = vld [vmem:[%s947 + $0x108] sm:$0xff]
    %v982 = vld [vmem:[%s947 + $0x110] sm:$0xff]
    %v983 = vld [vmem:[%s947 + $0x118] sm:$0xff]
    %v984 = vld [vmem:[%s947 + $0x120] sm:$0xff]
    %v985 = vld [vmem:[%s947 + $0x128] sm:$0xff]
    %v986 = vld [vmem:[%s947 + $0x130] sm:$0xff]
    %v987 = vld [vmem:[%s947 + $0x138] sm:$0xff]
    %v988 = vld [vmem:[%s947 + $0x140] sm:$0xff]
    %v989 = vld [vmem:[%s947 + $0x148] sm:$0xff]
    %v990 = vld [vmem:[%s947 + $0x150] sm:$0xff]
    %v991 = vld [vmem:[%s947 + $0x158] sm:$0xff]
    %v992 = vld [vmem:[%s947 + $0x160] sm:$0xff]
    %v993 = vld [vmem:[%s947 + $0x168] sm:$0xff]
    %v994 = vld [vmem:[%s947 + $0x170] sm:$0xff]
    %v995 = vld [vmem:[%s947 + $0x178] sm:$0xff]
    %v996 = vld [vmem:[%s947 + $0x180] sm:$0xff]
    %v997 = vld [vmem:[%s947 + $0x188] sm:$0xff]
    %v998 = vld [vmem:[%s947 + $0x190] sm:$0xff]
    %v999 = vld [vmem:[%s947 + $0x198] sm:$0xff]
    %v1000 = vld [vmem:[%s947 + $0x1a0] sm:$0xff]
    %v1001 = vld [vmem:[%s947 + $0x1a8] sm:$0xff]
    %v1002 = vld [vmem:[%s947 + $0x1b0] sm:$0xff]
    %v1003 = vld [vmem:[%s947 + $0x1b8] sm:$0xff]
    %v1004 = vld [vmem:[%s947 + $0x1c0] sm:$0xff]
    %v1005 = vld [vmem:[%s947 + $0x1c8] sm:$0xff]
    %v1006 = vld [vmem:[%s947 + $0x1d0] sm:$0xff]
    %v1007 = vld [vmem:[%s947 + $0x1d8] sm:$0xff]
    %v1008 = vld [vmem:[%s947 + $0x1e0] sm:$0xff]
    %v1009 = vld [vmem:[%s947 + $0x1e8] sm:$0xff]
    %v1010 = vld [vmem:[%s947 + $0x1f0] sm:$0xff]
    %v1011 = vld [vmem:[%s947 + $0x1f8] sm:$0xff]
    %1012 = vmatprep.subr.mxu0 %v949
    %1013 = vmatpush1.msra.mxu0 %v948
    %1014 = vmatprep.subr.mxu0 %v951
    %1015 = vmatpush1.msra.mxu0 %v950
    %1016 = vmatprep.subr.mxu0 %v953
    %1017 = vmatpush1.msra.mxu0 %v952
    %1018 = vmatprep.subr.mxu0 %v955
    %1019 = vmatpush1.msra.mxu0 %v954
    %1020 = vmatprep.subr.mxu0 %v957
    %1021 = vmatpush1.msra.mxu0 %v956
    %1022 = vmatprep.subr.mxu0 %v959
    %1023 = vmatpush1.msra.mxu0 %v958
    %1024 = vmatprep.subr.mxu0 %v961
    %1025 = vmatpush1.msra.mxu0 %v960
    %1026 = vmatprep.subr.mxu0 %v963
    %1027 = vmatpush1.msra.mxu0 %v962
    %1028 = vmatprep.subr.mxu0 %v965
    %1029 = vmatpush1.msra.mxu0 %v964
    %1030 = vmatprep.subr.mxu0 %v967
    %1031 = vmatpush1.msra.mxu0 %v966
    %1032 = vmatprep.subr.mxu0 %v969
    %1033 = vmatpush1.msra.mxu0 %v968
    %1034 = vmatprep.subr.mxu0 %v971
    %1035 = vmatpush1.msra.mxu0 %v970
    %1036 = vmatprep.subr.mxu0 %v973
    %1037 = vmatpush1.msra.mxu0 %v972
    %1038 = vmatprep.subr.mxu0 %v975
    %1039 = vmatpush1.msra.mxu0 %v974
    %1040 = vmatprep.subr.mxu0 %v977
    %1041 = vmatpush1.msra.mxu0 %v976
    %1042 = vmatprep.subr.mxu0 %v979
    %1043 = vmatpush1.msra.mxu0 %v978
    %1044 = vmatprep.subr.mxu0 %v981
    %1045 = vmatpush1.msra.mxu0 %v980
    %1046 = vmatprep.subr.mxu0 %v983
    %1047 = vmatpush1.msra.mxu0 %v982
    %1048 = vmatprep.subr.mxu0 %v985
    %1049 = vmatpush1.msra.mxu0 %v984
    %1050 = vmatprep.subr.mxu0 %v987
    %1051 = vmatpush1.msra.mxu0 %v986
    %1052 = vmatprep.subr.mxu0 %v989
    %1053 = vmatpush1.msra.mxu0 %v988
    %1054 = vmatprep.subr.mxu0 %v991
    %1055 = vmatpush1.msra.mxu0 %v990
    %1056 = vmatprep.subr.mxu0 %v993
    %1057 = vmatpush1.msra.mxu0 %v992
    %1058 = vmatprep.subr.mxu0 %v995
    %1059 = vmatpush1.msra.mxu0 %v994
    %1060 = vmatprep.subr.mxu0 %v997
    %1061 = vmatpush1.msra.mxu0 %v996
    %1062 = vmatprep.subr.mxu0 %v999
    %1063 = vmatpush1.msra.mxu0 %v998
    %1064 = vmatprep.subr.mxu0 %v1001
    %1065 = vmatpush1.msra.mxu0 %v1000
    %1066 = vmatprep.subr.mxu0 %v1003
    %1067 = vmatpush1.msra.mxu0 %v1002
    %1068 = vmatprep.subr.mxu0 %v1005
    %1069 = vmatpush1.msra.mxu0 %v1004
    %1070 = vmatprep.subr.mxu0 %v1007
    %1071 = vmatpush1.msra.mxu0 %v1006
    %1072 = vmatprep.subr.mxu0 %v1009
    %1073 = vmatpush1.msra.mxu0 %v1008
    %1074 = vmatprep.subr.mxu0 %v1011
    %1075 = vmatpush1.msra.mxu0 %v1010
    %1076 = vmatprep.mubr.f32.mxu0 %v946
    %1077 = vmatmul.mubr.f32.gmra.mrb[0].mxu0 %v945
    %v1078 = vpop.f32.mrb[0].mxu0
    %v1079 = vadd.f32 0.0, %v1078
    %v1080 = vpop.f32.mrb[0].mxu0
    %v1081 = vadd.f32 0.0, %v1080
    %1082 = vdwg.mxu0
    %v1083 = vadd.f32 %v839, %v1079
    %v1084 = vadd.f32 %v840, %v1081
    %s1085 = scalar_lea.vmem [#allocation5], 1024
    %v1086 = vld [vmem:[%s1085] sm:$0xff]
    %v1087 = vld [vmem:[%s1085 + $0x8] sm:$0xff]
    %v1088 = vld [vmem:[%s1085 + $0x10] sm:$0xff]
    %v1089 = vld [vmem:[%s1085 + $0x18] sm:$0xff]
    %v1090 = vld [vmem:[%s1085 + $0x20] sm:$0xff]
    %v1091 = vld [vmem:[%s1085 + $0x28] sm:$0xff]
    %v1092 = vld [vmem:[%s1085 + $0x30] sm:$0xff]
    %v1093 = vld [vmem:[%s1085 + $0x38] sm:$0xff]
    %v1094 = vld [vmem:[%s1085 + $0x40] sm:$0xff]
    %v1095 = vld [vmem:[%s1085 + $0x48] sm:$0xff]
    %v1096 = vld [vmem:[%s1085 + $0x50] sm:$0xff]
    %v1097 = vld [vmem:[%s1085 + $0x58] sm:$0xff]
    %v1098 = vld [vmem:[%s1085 + $0x60] sm:$0xff]
    %v1099 = vld [vmem:[%s1085 + $0x68] sm:$0xff]
    %v1100 = vld [vmem:[%s1085 + $0x70] sm:$0xff]
    %v1101 = vld [vmem:[%s1085 + $0x78] sm:$0xff]
    %v1102 = vld [vmem:[%s1085 + $0x80] sm:$0xff]
    %v1103 = vld [vmem:[%s1085 + $0x88] sm:$0xff]
    %v1104 = vld [vmem:[%s1085 + $0x90] sm:$0xff]
    %v1105 = vld [vmem:[%s1085 + $0x98] sm:$0xff]
    %v1106 = vld [vmem:[%s1085 + $0xa0] sm:$0xff]
    %v1107 = vld [vmem:[%s1085 + $0xa8] sm:$0xff]
    %v1108 = vld [vmem:[%s1085 + $0xb0] sm:$0xff]
    %v1109 = vld [vmem:[%s1085 + $0xb8] sm:$0xff]
    %v1110 = vld [vmem:[%s1085 + $0xc0] sm:$0xff]
    %v1111 = vld [vmem:[%s1085 + $0xc8] sm:$0xff]
    %v1112 = vld [vmem:[%s1085 + $0xd0] sm:$0xff]
    %v1113 = vld [vmem:[%s1085 + $0xd8] sm:$0xff]
    %v1114 = vld [vmem:[%s1085 + $0xe0] sm:$0xff]
    %v1115 = vld [vmem:[%s1085 + $0xe8] sm:$0xff]
    %v1116 = vld [vmem:[%s1085 + $0xf0] sm:$0xff]
    %v1117 = vld [vmem:[%s1085 + $0xf8] sm:$0xff]
    %1118 = vmatprep.subr.mxu0 %v1087
    %1119 = vmatpush1.msra.mxu0 %v1086
    %1120 = vmatprep.subr.mxu0 %v1089
    %1121 = vmatpush1.msra.mxu0 %v1088
    %1122 = vmatprep.subr.mxu0 %v1091
    %1123 = vmatpush1.msra.mxu0 %v1090
    %1124 = vmatprep.subr.mxu0 %v1093
    %1125 = vmatpush1.msra.mxu0 %v1092
    %1126 = vmatprep.subr.mxu0 %v1095
    %1127 = vmatpush1.msra.mxu0 %v1094
    %1128 = vmatprep.subr.mxu0 %v1097
    %1129 = vmatpush1.msra.mxu0 %v1096
    %1130 = vmatprep.subr.mxu0 %v1099
    %1131 = vmatpush1.msra.mxu0 %v1098
    %1132 = vmatprep.subr.mxu0 %v1101
    %1133 = vmatpush1.msra.mxu0 %v1100
    %1134 = vmatprep.subr.mxu0 %v1103
    %1135 = vmatpush1.msra.mxu0 %v1102
    %1136 = vmatprep.subr.mxu0 %v1105
    %1137 = vmatpush1.msra.mxu0 %v1104
    %1138 = vmatprep.subr.mxu0 %v1107
    %1139 = vmatpush1.msra.mxu0 %v1106
    %1140 = vmatprep.subr.mxu0 %v1109
    %1141 = vmatpush1.msra.mxu0 %v1108
    %1142 = vmatprep.subr.mxu0 %v1111
    %1143 = vmatpush1.msra.mxu0 %v1110
    %1144 = vmatprep.subr.mxu0 %v1113
    %1145 = vmatpush1.msra.mxu0 %v1112
    %1146 = vmatprep.subr.mxu0 %v1115
    %1147 = vmatpush1.msra.mxu0 %v1114
    %1148 = vmatprep.subr.mxu0 %v1117
    %1149 = vmatpush1.msra.mxu0 %v1116
    %1150 = vmatprep.subr.mxu0 0.0
    %1151 = vmatpush1.msra.mxu0 0.0
    %1152 = vmatprep.subr.mxu0 0.0
    %1153 = vmatpush1.msra.mxu0 0.0
    %1154 = vmatprep.subr.mxu0 0.0
    %1155 = vmatpush1.msra.mxu0 0.0
    %1156 = vmatprep.subr.mxu0 0.0
    %1157 = vmatpush1.msra.mxu0 0.0
    %1158 = vmatprep.subr.mxu0 0.0
    %1159 = vmatpush1.msra.mxu0 0.0
    %1160 = vmatprep.subr.mxu0 0.0
    %1161 = vmatpush1.msra.mxu0 0.0
    %1162 = vmatprep.subr.mxu0 0.0
    %1163 = vmatpush1.msra.mxu0 0.0
    %1164 = vmatprep.subr.mxu0 0.0
    %1165 = vmatpush1.msra.mxu0 0.0
    %1166 = vmatprep.subr.mxu0 0.0
    %1167 = vmatpush1.msra.mxu0 0.0
    %1168 = vmatprep.subr.mxu0 0.0
    %1169 = vmatpush1.msra.mxu0 0.0
    %1170 = vmatprep.subr.mxu0 0.0
    %1171 = vmatpush1.msra.mxu0 0.0
    %1172 = vmatprep.subr.mxu0 0.0
    %1173 = vmatpush1.msra.mxu0 0.0
    %1174 = vmatprep.subr.mxu0 0.0
    %1175 = vmatpush1.msra.mxu0 0.0
    %1176 = vmatprep.subr.mxu0 0.0
    %1177 = vmatpush1.msra.mxu0 0.0
    %1178 = vmatprep.subr.mxu0 0.0
    %1179 = vmatpush1.msra.mxu0 0.0
    %1180 = vmatprep.subr.mxu0 0.0
    %1181 = vmatpush1.msra.mxu0 0.0
    %1182 = vmatprep.mubr.f32.mxu0 0.0
    %1183 = vmatmul.mubr.f32.gmra.mrb[0].mxu0 %v102
    %v1184 = vpop.f32.mrb[0].mxu0
    %v1185 = vadd.f32 %v140, %v1184
    %v1186 = vpop.f32.mrb[0].mxu0
    %v1187 = vadd.f32 %v144, %v1186
    %1188 = vdwg.mxu0
    %v1189 = vmax.f32 %v1185, 0.0
    %v1190 = vmax.f32 %v1187, 0.0
    %s1191 = scalar_lea.vmem [#allocation8], 2048
    %v1192 = vld [vmem:[%s1191] sm:$0xff]
    %v1193 = vld [vmem:[%s1191 + $0x8] sm:$0xff]
    %v1194 = vld [vmem:[%s1191 + $0x10] sm:$0xff]
    %v1195 = vld [vmem:[%s1191 + $0x18] sm:$0xff]
    %v1196 = vld [vmem:[%s1191 + $0x20] sm:$0xff]
    %v1197 = vld [vmem:[%s1191 + $0x28] sm:$0xff]
    %v1198 = vld [vmem:[%s1191 + $0x30] sm:$0xff]
    %v1199 = vld [vmem:[%s1191 + $0x38] sm:$0xff]
    %v1200 = vld [vmem:[%s1191 + $0x40] sm:$0xff]
    %v1201 = vld [vmem:[%s1191 + $0x48] sm:$0xff]
    %v1202 = vld [vmem:[%s1191 + $0x50] sm:$0xff]
    %v1203 = vld [vmem:[%s1191 + $0x58] sm:$0xff]
    %v1204 = vld [vmem:[%s1191 + $0x60] sm:$0xff]
    %v1205 = vld [vmem:[%s1191 + $0x68] sm:$0xff]
    %v1206 = vld [vmem:[%s1191 + $0x70] sm:$0xff]
    %v1207 = vld [vmem:[%s1191 + $0x78] sm:$0xff]
    %v1208 = vld [vmem:[%s1191 + $0x80] sm:$0xff]
    %v1209 = vld [vmem:[%s1191 + $0x88] sm:$0xff]
    %v1210 = vld [vmem:[%s1191 + $0x90] sm:$0xff]
    %v1211 = vld [vmem:[%s1191 + $0x98] sm:$0xff]
    %v1212 = vld [vmem:[%s1191 + $0xa0] sm:$0xff]
    %v1213 = vld [vmem:[%s1191 + $0xa8] sm:$0xff]
    %v1214 = vld [vmem:[%s1191 + $0xb0] sm:$0xff]
    %v1215 = vld [vmem:[%s1191 + $0xb8] sm:$0xff]
    %v1216 = vld [vmem:[%s1191 + $0xc0] sm:$0xff]
    %v1217 = vld [vmem:[%s1191 + $0xc8] sm:$0xff]
    %v1218 = vld [vmem:[%s1191 + $0xd0] sm:$0xff]
    %v1219 = vld [vmem:[%s1191 + $0xd8] sm:$0xff]
    %v1220 = vld [vmem:[%s1191 + $0xe0] sm:$0xff]
    %v1221 = vld [vmem:[%s1191 + $0xe8] sm:$0xff]
    %v1222 = vld [vmem:[%s1191 + $0xf0] sm:$0xff]
    %v1223 = vld [vmem:[%s1191 + $0xf8] sm:$0xff]
    %v1224 = vld [vmem:[%s1191 + $0x100] sm:$0xff]
    %v1225 = vld [vmem:[%s1191 + $0x108] sm:$0xff]
    %v1226 = vld [vmem:[%s1191 + $0x110] sm:$0xff]
    %v1227 = vld [vmem:[%s1191 + $0x118] sm:$0xff]
    %v1228 = vld [vmem:[%s1191 + $0x120] sm:$0xff]
    %v1229 = vld [vmem:[%s1191 + $0x128] sm:$0xff]
    %v1230 = vld [vmem:[%s1191 + $0x130] sm:$0xff]
    %v1231 = vld [vmem:[%s1191 + $0x138] sm:$0xff]
    %v1232 = vld [vmem:[%s1191 + $0x140] sm:$0xff]
    %v1233 = vld [vmem:[%s1191 + $0x148] sm:$0xff]
    %v1234 = vld [vmem:[%s1191 + $0x150] sm:$0xff]
    %v1235 = vld [vmem:[%s1191 + $0x158] sm:$0xff]
    %v1236 = vld [vmem:[%s1191 + $0x160] sm:$0xff]
    %v1237 = vld [vmem:[%s1191 + $0x168] sm:$0xff]
    %v1238 = vld [vmem:[%s1191 + $0x170] sm:$0xff]
    %v1239 = vld [vmem:[%s1191 + $0x178] sm:$0xff]
    %v1240 = vld [vmem:[%s1191 + $0x180] sm:$0xff]
    %v1241 = vld [vmem:[%s1191 + $0x188] sm:$0xff]
    %v1242 = vld [vmem:[%s1191 + $0x190] sm:$0xff]
    %v1243 = vld [vmem:[%s1191 + $0x198] sm:$0xff]
    %v1244 = vld [vmem:[%s1191 + $0x1a0] sm:$0xff]
    %v1245 = vld [vmem:[%s1191 + $0x1a8] sm:$0xff]
    %v1246 = vld [vmem:[%s1191 + $0x1b0] sm:$0xff]
    %v1247 = vld [vmem:[%s1191 + $0x1b8] sm:$0xff]
    %v1248 = vld [vmem:[%s1191 + $0x1c0] sm:$0xff]
    %v1249 = vld [vmem:[%s1191 + $0x1c8] sm:$0xff]
    %v1250 = vld [vmem:[%s1191 + $0x1d0] sm:$0xff]
    %v1251 = vld [vmem:[%s1191 + $0x1d8] sm:$0xff]
    %v1252 = vld [vmem:[%s1191 + $0x1e0] sm:$0xff]
    %v1253 = vld [vmem:[%s1191 + $0x1e8] sm:$0xff]
    %v1254 = vld [vmem:[%s1191 + $0x1f0] sm:$0xff]
    %v1255 = vld [vmem:[%s1191 + $0x1f8] sm:$0xff]
    %1256 = vmatprep.subr.mxu0 %v1193
    %1257 = vmatpush1.msra.mxu0 %v1192
    %1258 = vmatprep.subr.mxu0 %v1195
    %1259 = vmatpush1.msra.mxu0 %v1194
    %1260 = vmatprep.subr.mxu0 %v1197
    %1261 = vmatpush1.msra.mxu0 %v1196
    %1262 = vmatprep.subr.mxu0 %v1199
    %1263 = vmatpush1.msra.mxu0 %v1198
    %1264 = vmatprep.subr.mxu0 %v1201
    %1265 = vmatpush1.msra.mxu0 %v1200
    %1266 = vmatprep.subr.mxu0 %v1203
    %1267 = vmatpush1.msra.mxu0 %v1202
    %1268 = vmatprep.subr.mxu0 %v1205
    %1269 = vmatpush1.msra.mxu0 %v1204
    %1270 = vmatprep.subr.mxu0 %v1207
    %1271 = vmatpush1.msra.mxu0 %v1206
    %1272 = vmatprep.subr.mxu0 %v1209
    %1273 = vmatpush1.msra.mxu0 %v1208
    %1274 = vmatprep.subr.mxu0 %v1211
    %1275 = vmatpush1.msra.mxu0 %v1210
    %1276 = vmatprep.subr.mxu0 %v1213
    %1277 = vmatpush1.msra.mxu0 %v1212
    %1278 = vmatprep.subr.mxu0 %v1215
    %1279 = vmatpush1.msra.mxu0 %v1214
    %1280 = vmatprep.subr.mxu0 %v1217
    %1281 = vmatpush1.msra.mxu0 %v1216
    %1282 = vmatprep.subr.mxu0 %v1219
    %1283 = vmatpush1.msra.mxu0 %v1218
    %1284 = vmatprep.subr.mxu0 %v1221
    %1285 = vmatpush1.msra.mxu0 %v1220
    %1286 = vmatprep.subr.mxu0 %v1223
    %1287 = vmatpush1.msra.mxu0 %v1222
    %1288 = vmatprep.subr.mxu0 %v1225
    %1289 = vmatpush1.msra.mxu0 %v1224
    %1290 = vmatprep.subr.mxu0 %v1227
    %1291 = vmatpush1.msra.mxu0 %v1226
    %1292 = vmatprep.subr.mxu0 %v1229
    %1293 = vmatpush1.msra.mxu0 %v1228
    %1294 = vmatprep.subr.mxu0 %v1231
    %1295 = vmatpush1.msra.mxu0 %v1230
    %1296 = vmatprep.subr.mxu0 %v1233
    %1297 = vmatpush1.msra.mxu0 %v1232
    %1298 = vmatprep.subr.mxu0 %v1235
    %1299 = vmatpush1.msra.mxu0 %v1234
    %1300 = vmatprep.subr.mxu0 %v1237
    %1301 = vmatpush1.msra.mxu0 %v1236
    %1302 = vmatprep.subr.mxu0 %v1239
    %1303 = vmatpush1.msra.mxu0 %v1238
    %1304 = vmatprep.subr.mxu0 %v1241
    %1305 = vmatpush1.msra.mxu0 %v1240
    %1306 = vmatprep.subr.mxu0 %v1243
    %1307 = vmatpush1.msra.mxu0 %v1242
    %1308 = vmatprep.subr.mxu0 %v1245
    %1309 = vmatpush1.msra.mxu0 %v1244
    %1310 = vmatprep.subr.mxu0 %v1247
    %1311 = vmatpush1.msra.mxu0 %v1246
    %1312 = vmatprep.subr.mxu0 %v1249
    %1313 = vmatpush1.msra.mxu0 %v1248
    %1314 = vmatprep.subr.mxu0 %v1251
    %1315 = vmatpush1.msra.mxu0 %v1250
    %1316 = vmatprep.subr.mxu0 %v1253
    %1317 = vmatpush1.msra.mxu0 %v1252
    %1318 = vmatprep.subr.mxu0 %v1255
    %1319 = vmatpush1.msra.mxu0 %v1254
    %1320 = vmatprep.mubr.f32.mxu0 %v1190
    %1321 = vmatmul.mubr.f32.gmra.mrb[0].mxu0 %v1189
    %v1322 = vpop.f32.mrb[0].mxu0
    %v1323 = vadd.f32 0.0, %v1322
    %v1324 = vpop.f32.mrb[0].mxu0
    %v1325 = vadd.f32 0.0, %v1324
    %1326 = vdwg.mxu0
    %v1327 = vadd.f32 %v1083, %v1323
    %v1328 = vadd.f32 %v1084, %v1325
    %v1329 = vld [vmem:[#allocation10] sm:$0x3]
    %v1331 = vlaneseq
    %v1332 = vshrl.u32 %v1331, 7
    %v1333 = vsub.s32 0, %v1332
    %v1334 = vrot.slane %v1329, %v1333
    %v1335 = vlaneseq
    %v1336 = vshrl.u32 %v1335, 7
    %v1337 = vsub.s32 1, %v1336
    %v1338 = vrot.slane %v1329, %v1337
    %v1341 = vadd.f32 %v1327, %v1334
    %v1342 = vadd.f32 %v1328, %v1338
    %v1343 = vmax.f32 %v1341, 0.0
    %v1344 = vmax.f32 %v1342, 0.0
    %v1345 = vld [vmem:[#allocation11] sm:$0x3]
    %v1347 = vlaneseq
    %v1348 = vshrl.u32 %v1347, 7
    %v1349 = vsub.s32 0, %v1348
    %v1350 = vrot.slane %v1345, %v1349
    %v1351 = vlaneseq
    %v1352 = vshrl.u32 %v1351, 7
    %v1353 = vsub.s32 1, %v1352
    %v1354 = vrot.slane %v1345, %v1353
    %v1357 = vmul.f32 %v1343, %v1350
    %v1358 = vmul.f32 %v1344, %v1354
    %v1359 = vadd.f32 %v1357, %v1358
    %1360 = vadd.xlane.f32.xlu0 %v1359
    %v1361 = vpop.xlane.xlu0 %1360
    %v1362 = vld [vmem:[#allocation2] sm:$0x1]
    %v1364 = vlaneseq
    %v1365 = vshrl.u32 %v1364, 7
    %v1366 = vsub.s32 0, %v1365
    %v1367 = vrot.slane %v1362, %v1366
    %v1369 = vadd.f32 %v1361, %v1367
    %vm1370 = vcmask 7168
    %1371 = vst.msk [vmem:[%s7] sm:$0xff] %vm1370, %v1369
    // Predicated region
    $region54: #{tpu_custom_call.1} parent=1 // pred_check
      _
    $region55: #{tpu_custom_call.1} parent=1 // pred_check_branch
      %1373 = sbr.rel (0) target = $region57
    $region56: #{tpu_custom_call.1} parent=1 // pred_region
      _
    $region57: #{tpu_custom_call.1} parent=1 // pred_fallthru
      _
    // Predicated region
    $region58: #{tpu_custom_call.1} parent=1 // pred_check
      _
    $region59: #{tpu_custom_call.1} parent=1 // pred_check_branch
      %1375 = sbr.rel (0) target = $region61
    $region60: #{tpu_custom_call.1} parent=1 // pred_region
      _
    $region61: #{tpu_custom_call.1} parent=1 // pred_fallthru
      _
    %1376 = vsyncpa [#allocation4], 1
    %1377 = vsyncpa [#allocation6], 1
    %1378 = vsyncpa [#allocation9], 1
    %1379 = vsyncpa [#allocation12], 1

</llo_original>
